<compile_context>
chip_gen: v6e
topology: v6e:2x2x1
jax: 0.10.0
libtpu: 0.0.40
codegen_flags: <defaults>
</compile_context>

<pallas_src>
import functools
import math

import jax
import jax.numpy as jnp
from jax.experimental import pallas as pl
from jax.experimental.pallas import tpu as pltpu


def _layer_norm(x, gamma, beta, eps=1e-12):
    # x: (S, H) f32, gamma/beta: (1, H) f32
    u = jnp.mean(x, axis=-1, keepdims=True)
    s = jnp.mean((x - u) ** 2, axis=-1, keepdims=True)
    xn = (x - u) / jnp.sqrt(s + eps)
    return gamma * xn + beta


def encoder_stack_kernel(x_ref, mask_ref,
                         wqkv_ref, bqkv_ref, wao_ref, bao_ref, g1_ref, b1_ref,
                         wi_ref, bi_ref, wo_ref, bo_ref, g2_ref, b2_ref,
                         out_ref, hid_ref, *, num_heads):
    f32 = jnp.float32
    bf16 = jnp.bfloat16

    l = pl.program_id(0)          # layer index (sequential / "arbitrary")
    b = pl.program_id(1)          # batch index

    # Layer 0: seed the VMEM-resident hidden state from the HBM input block.
    @pl.when(l == 0)
    def _():
        hid_ref[b] = x_ref[0]

    xin = hid_ref[b]              # (S, H) f32 — previous layer's output
    mask = mask_ref[0]            # (1, S) additive mask, f32
    S, H = xin.shape
    hd = H // num_heads

    x_b = xin.astype(bf16)

    # --- fused Q|K|V projection (bf16 operands, f32 accumulation).
    #     1/sqrt(hd) is pre-folded into the Q slice of wqkv / bqkv. ---
    qkv = jnp.dot(x_b, wqkv_ref[0], preferred_element_type=f32) + bqkv_ref[0]
    q = qkv[:, :H]
    k = qkv[:, H:2 * H]
    v = qkv[:, 2 * H:]

    # --- batched multi-head attention: heads become a leading batch dim ---
    q3 = jnp.transpose(q.astype(bf16).reshape(S, num_heads, hd), (1, 0, 2))
    k3 = jnp.transpose(k.astype(bf16).reshape(S, num_heads, hd), (1, 0, 2))
    v3 = jnp.transpose(v.astype(bf16).reshape(S, num_heads, hd), (1, 0, 2))

    scores = jnp.einsum('hqd,hkd->hqk', q3, k3,
                        preferred_element_type=f32)          # (nh, S, S)
    scores = scores + mask[None]                             # (1, 1, S) bcast
    scores = scores - jnp.max(scores, axis=-1, keepdims=True)
    p = jnp.exp(scores)                                      # f32 softmax
    denom = jnp.sum(p, axis=-1, keepdims=True)
    probs = p * pl.reciprocal(denom, approx=True)

    ctx = jnp.einsum('hqk,hkd->hqd', probs.astype(bf16), v3,
                     preferred_element_type=f32)             # (nh, S, hd)
    ctx = jnp.transpose(ctx, (1, 0, 2)).reshape(S, H)        # (S, H) f32

    # --- SelfOutput: dense + residual + LayerNorm (f32 elementwise) ---
    attn = jnp.dot(ctx.astype(bf16), wao_ref[0],
                   preferred_element_type=f32) + bao_ref[0]
    attn = _layer_norm(attn + xin, g1_ref[0], b1_ref[0])

    # --- Intermediate: dense + ReLU ; Output: dense + residual + LayerNorm ---
    inter = jnp.dot(attn.astype(bf16), wi_ref[0],
                    preferred_element_type=f32) + bi_ref[0]
    inter = jnp.maximum(inter, 0.0)
    y = jnp.dot(inter.astype(bf16), wo_ref[0],
                preferred_element_type=f32) + bo_ref[0]
    y = _layer_norm(y + attn, g2_ref[0], b2_ref[0])

    hid_ref[b] = y                              # feed the next layer (VMEM)
    out_ref[0] = y.astype(out_ref.dtype)        # last layer's write wins in HBM


def _vmem_limit_bytes(B, S, H, I, num_heads):
    """Explicit scoped-VMEM budget from the resident footprint (+ headroom)."""
    bf, f4 = 2, 4
    w_layer = (3 * H * H + H * H + H * I + I * H) * bf        # wqkv, wao, wi, wo
    small_layer = (3 * H + H + I + H + 4 * H) * f4            # biases + LN params
    io = (S * H + S + S * H) * f4                             # x block, mask, out block
    resident = B * S * H * f4                                 # hidden-state scratch
    temps = (3 * S * H + 3 * num_heads * S * S + S * I + 6 * S * H) * f4
    est = 2 * (w_layer + small_layer + io) + resident + temps  # x2: double-buffer
    est = int(est * 1.5) + (4 << 20)                           # headroom
    return max(32 << 20, min(est, 100 << 20))


def encoder_multiple_layers(hidden_states, attention_mask, stacked, num_heads):
    """hidden_states: (B, S, H); attention_mask: (B, 1, 1, S) additive mask;
    stacked: dict of layer-stacked parameters from prepare_params."""
    B, S, H = hidden_states.shape
    L, _, I = stacked["wi"].shape
    mask3d = attention_mask.reshape(B, 1, S).astype(jnp.float32)
    x = hidden_states.astype(jnp.float32)

    def wspec(*shape):            # per-layer constant block, indexed by layer l
        n = len(shape)
        return pl.BlockSpec((1,) + shape, lambda l, b, _n=n: (l,) + (0,) * _n)

    kernel = functools.partial(encoder_stack_kernel, num_heads=num_heads)
    return pl.pallas_call(
        kernel,
        out_shape=jax.ShapeDtypeStruct((B, S, H), jnp.float32),
        grid=(L, B),
        in_specs=[
            pl.BlockSpec((1, S, H), lambda l, b: (b, 0, 0)),   # hidden states
            pl.BlockSpec((1, 1, S), lambda l, b: (b, 0, 0)),   # additive mask
            wspec(H, 3 * H), wspec(1, 3 * H),   # fused (scaled-Q)|K|V weights
            wspec(H, H), wspec(1, H),           # attention output dense
            wspec(1, H), wspec(1, H),           # LayerNorm1 gamma/beta
            wspec(H, I), wspec(1, I),           # intermediate dense
            wspec(I, H), wspec(1, H),           # output dense
            wspec(1, H), wspec(1, H),           # LayerNorm2 gamma/beta
        ],
        out_specs=pl.BlockSpec((1, S, H), lambda l, b: (b, 0, 0)),
        scratch_shapes=[pltpu.VMEM((B, S, H), jnp.float32)],   # resident hidden
        compiler_params=pltpu.CompilerParams(
            dimension_semantics=("arbitrary", "arbitrary"),
            vmem_limit_bytes=_vmem_limit_bytes(B, S, H, I, num_heads)),
    )(x, mask3d,
      stacked["wqkv"], stacked["bqkv"], stacked["wao"], stacked["bao"],
      stacked["g1"], stacked["b1"], stacked["wi"], stacked["bi"],
      stacked["wo"], stacked["bo"], stacked["g2"], stacked["b2"])


def prepare_params(raw_params, num_heads):
    """One-time host-side prep: fold 1/sqrt(hd) into Q, fuse Q|K|V weights,
    cast matmul weights to bf16 (biases / LayerNorm params stay f32), and
    stack every field along a leading layer axis."""
    H = raw_params[0]["wq"].shape[0]
    hd = H // num_heads
    scale = 1.0 / math.sqrt(hd)

    def stack(fn, dtype):
        return jnp.stack([fn(p) for p in raw_params]).astype(dtype)

    return dict(
        wqkv=stack(lambda p: jnp.concatenate(
            [p["wq"] * scale, p["wk"], p["wv"]], axis=1), jnp.bfloat16),
        bqkv=stack(lambda p: jnp.concatenate(
            [p["bq"] * scale, p["bk"], p["bv"]], axis=1), jnp.float32),
        wao=stack(lambda p: p["wao"], jnp.bfloat16),
        bao=stack(lambda p: p["bao"], jnp.float32),
        g1=stack(lambda p: p["g1"], jnp.float32),
        b1=stack(lambda p: p["b1"], jnp.float32),
        wi=stack(lambda p: p["wi"], jnp.bfloat16),
        bi=stack(lambda p: p["bi"], jnp.float32),
        wo=stack(lambda p: p["wo"], jnp.bfloat16),
        bo=stack(lambda p: p["bo"], jnp.float32),
        g2=stack(lambda p: p["g2"], jnp.float32),
        b2=stack(lambda p: p["b2"], jnp.float32),
    )


def make_params(key, n_layer, hidden_size, intermediate_size):
    """Deterministic synthetic parameters. Linear weights stored as (in, out)."""
    H, I = hidden_size, intermediate_size
    params = []
    for _ in range(n_layer):
        key, *ks = jax.random.split(key, 13)

        def w(k, shape, scale=0.05):
            return (scale * jax.random.normal(k, shape)).astype(jnp.float32)

        params.append(dict(
            wq=w(ks[0], (H, H)),  bq=w(ks[1], (1, H)),
            wk=w(ks[2], (H, H)),  bk=w(ks[3], (1, H)),
            wv=w(ks[4], (H, H)),  bv=w(ks[5], (1, H)),
            wao=w(ks[6], (H, H)), bao=w(ks[7], (1, H)),
            g1=jnp.ones((1, H), jnp.float32), b1=jnp.zeros((1, H), jnp.float32),
            wi=w(ks[8], (H, I)),  bi=w(ks[9], (1, I)),
            wo=w(ks[10], (I, H)), bo=w(ks[11], (1, H)),
            g2=jnp.ones((1, H), jnp.float32), b2=jnp.zeros((1, H), jnp.float32),
        ))
    return params


def encoder_ref(x, mask4d, raw_params, num_heads):
    """Pure-JAX f32 reference matching the PyTorch module (eval mode)."""
    B, S, H = x.shape
    hd = H // num_heads

    def ln(t, g, bta):
        u = t.mean(-1, keepdims=True)
        var = ((t - u) ** 2).mean(-1, keepdims=True)
        return g * (t - u) / jnp.sqrt(var + 1e-12) + bta

    for p in raw_params:
        def split(t):
            return t.reshape(B, S, num_heads, hd).transpose(0, 2, 1, 3)
        q = split(x @ p["wq"] + p["bq"])
        k = split(x @ p["wk"] + p["bk"])
        v = split(x @ p["wv"] + p["bv"])
        s = (q @ k.transpose(0, 1, 3, 2)) / math.sqrt(hd) + mask4d
        probs = jax.nn.softmax(s, axis=-1)
        ctx = (probs @ v).transpose(0, 2, 1, 3).reshape(B, S, H)
        attn = ln(ctx @ p["wao"] + p["bao"] + x, p["g1"], p["b1"])
        inter = jax.nn.relu(attn @ p["wi"] + p["bi"])
        x = ln(inter @ p["wo"] + p["bo"] + attn, p["g2"], p["b2"])
    return x


if __name__ == "__main__":
    B, S, H, I = 2, 8, 32, 64          # batch, seq, hidden, intermediate
    NUM_HEADS, N_LAYER = 4, 2
    # NOTE: for real deployments pick S and H as multiples of 128 so every
    # block is lane-dense (unmasked vst); these toy shapes are for correctness.

    key = jax.random.PRNGKey(0)
    k_x, k_m, k_p = jax.random.split(key, 3)

    hidden_states = jax.random.normal(k_x, (B, S, H), dtype=jnp.float32)
    # BERT-style additive mask: 0 for tokens to keep, -10000 for padded ones.
    pad = (jax.random.uniform(k_m, (B, S)) > 0.8).astype(jnp.float32)
    attention_mask = (pad * -10000.0)[:, None, None, :]     # (B, 1, 1, S)

    raw_params = make_params(k_p, N_LAYER, H, I)
    stacked = prepare_params(raw_params, NUM_HEADS)

    out = encoder_multiple_layers(hidden_states, attention_mask, stacked,
                                  NUM_HEADS)
    jax.block_until_ready(out)
    assert out.shape == (B, S, H)

    ref = encoder_ref(hidden_states.astype(jnp.float32), attention_mask,
                      raw_params, NUM_HEADS)
    err = float(jnp.max(jnp.abs(out - ref)))
    assert err < 1e-1, f"max abs error vs reference = {err}"
    print("KERNEL_OK")
</pallas_src>

<mosaic_0001>
module attributes {stable_mosaic.version = 11 : i64} {
  func.func @encoder_stack_kernel(%arg0: i32, %arg1: i32, %arg2: memref<1x8x32xf32, #tpu.memory_space<vmem>>, %arg3: memref<1x1x8xf32, #tpu.memory_space<vmem>>, %arg4: memref<1x32x96xbf16, #tpu.memory_space<vmem>>, %arg5: memref<1x1x96xf32, #tpu.memory_space<vmem>>, %arg6: memref<1x32x32xbf16, #tpu.memory_space<vmem>>, %arg7: memref<1x1x32xf32, #tpu.memory_space<vmem>>, %arg8: memref<1x1x32xf32, #tpu.memory_space<vmem>>, %arg9: memref<1x1x32xf32, #tpu.memory_space<vmem>>, %arg10: memref<1x32x64xbf16, #tpu.memory_space<vmem>>, %arg11: memref<1x1x64xf32, #tpu.memory_space<vmem>>, %arg12: memref<1x64x32xbf16, #tpu.memory_space<vmem>>, %arg13: memref<1x1x32xf32, #tpu.memory_space<vmem>>, %arg14: memref<1x1x32xf32, #tpu.memory_space<vmem>>, %arg15: memref<1x1x32xf32, #tpu.memory_space<vmem>>, %arg16: memref<1x8x32xf32, #tpu.memory_space<vmem>>, %arg17: memref<2x8x32xf32, #tpu.memory_space<vmem>>) attributes {dimension_semantics = [#tpu.dimension_semantics<arbitrary>, #tpu.dimension_semantics<arbitrary>], iteration_bounds = array<i64: 2, 2>, scalar_prefetch = 0 : i64, scratch_operands = 1 : i64, tpu.core_type = #tpu.core_type<tc>, window_params = [{transform_indices = @transform_0, window_bounds = array<i64: 1, 8, 32>}, {transform_indices = @transform_1, window_bounds = array<i64: 1, 1, 8>}, {transform_indices = @transform_2, window_bounds = array<i64: 1, 32, 96>}, {transform_indices = @transform_3, window_bounds = array<i64: 1, 1, 96>}, {transform_indices = @transform_4, window_bounds = array<i64: 1, 32, 32>}, {transform_indices = @transform_5, window_bounds = array<i64: 1, 1, 32>}, {transform_indices = @transform_6, window_bounds = array<i64: 1, 1, 32>}, {transform_indices = @transform_7, window_bounds = array<i64: 1, 1, 32>}, {transform_indices = @transform_8, window_bounds = array<i64: 1, 32, 64>}, {transform_indices = @transform_9, window_bounds = array<i64: 1, 1, 64>}, {transform_indices = @transform_10, window_bounds = array<i64: 1, 64, 32>}, {transform_indices = @transform_11, window_bounds = array<i64: 1, 1, 32>}, {transform_indices = @transform_12, window_bounds = array<i64: 1, 1, 32>}, {transform_indices = @transform_13, window_bounds = array<i64: 1, 1, 32>}, {transform_indices = @transform_14, window_bounds = array<i64: 1, 8, 32>}]} {
    %c0_i32 = arith.constant 0 : i32
    %0 = arith.cmpi eq, %arg0, %c0_i32 : i32
    %1 = arith.extui %0 : i1 to i32
    %c0_i32_0 = arith.constant 0 : i32
    %2 = arith.cmpi ne, %1, %c0_i32_0 : i32
    scf.if %2 {
      %c0_64 = arith.constant 0 : index
      %c0_65 = arith.constant 0 : index
      %c0_66 = arith.constant 0 : index
      %133 = vector.load %arg2[%c0_64, %c0_65, %c0_66] : memref<1x8x32xf32, #tpu.memory_space<vmem>>, vector<1x8x32xf32>
      %134 = vector.shape_cast %133 : vector<1x8x32xf32> to vector<8x32xf32>
      %135 = arith.index_cast %arg1 : i32 to index
      %c0_67 = arith.constant 0 : index
      %c0_68 = arith.constant 0 : index
      %136 = vector.load %arg17[%135, %c0_67, %c0_68] : memref<2x8x32xf32, #tpu.memory_space<vmem>>, vector<1x8x32xf32>
      %137 = vector.shape_cast %136 : vector<1x8x32xf32> to vector<8x32xf32>
      %138 = vector.shape_cast %134 : vector<8x32xf32> to vector<1x8x32xf32>
      tpu.vector_store %arg17[%135, %c0_67, %c0_68], %138 {strides = array<i32>} : memref<2x8x32xf32, #tpu.memory_space<vmem>>, vector<1x8x32xf32>,
    } else {
    }
    %3 = arith.index_cast %arg1 : i32 to index
    %c0 = arith.constant 0 : index
    %c0_1 = arith.constant 0 : index
    %4 = vector.load %arg17[%3, %c0, %c0_1] : memref<2x8x32xf32, #tpu.memory_space<vmem>>, vector<1x8x32xf32>
    %5 = vector.shape_cast %4 : vector<1x8x32xf32> to vector<8x32xf32>
    %c0_2 = arith.constant 0 : index
    %c0_3 = arith.constant 0 : index
    %c0_4 = arith.constant 0 : index
    %6 = vector.load %arg3[%c0_2, %c0_3, %c0_4] : memref<1x1x8xf32, #tpu.memory_space<vmem>>, vector<1x1x8xf32>
    %7 = vector.shape_cast %6 : vector<1x1x8xf32> to vector<1x8xf32>
    %8 = arith.truncf %5 : vector<8x32xf32> to vector<8x32xbf16>
    %c0_5 = arith.constant 0 : index
    %c0_6 = arith.constant 0 : index
    %c0_7 = arith.constant 0 : index
    %9 = vector.load %arg4[%c0_5, %c0_6, %c0_7] : memref<1x32x96xbf16, #tpu.memory_space<vmem>>, vector<1x32x96xbf16>
    %10 = vector.shape_cast %9 : vector<1x32x96xbf16> to vector<32x96xbf16>
    %cst = arith.constant dense<0.000000e+00> : vector<8x96xf32>
    %11 = tpu.matmul %8, %10, %cst {dimension_numbers = #tpu.dot_dimension_numbers<[1], [0], [0], [1], [0, 0, 1, 1], [], []>} : vector<8x32xbf16>, vector<32x96xbf16>, vector<8x96xf32> -> vector<8x96xf32>
    %c0_8 = arith.constant 0 : index
    %c0_9 = arith.constant 0 : index
    %c0_10 = arith.constant 0 : index
    %12 = vector.load %arg5[%c0_8, %c0_9, %c0_10] : memref<1x1x96xf32, #tpu.memory_space<vmem>>, vector<1x1x96xf32>
    %13 = vector.shape_cast %12 : vector<1x1x96xf32> to vector<1x96xf32>
    %14 = vector.broadcast %13 : vector<1x96xf32> to vector<8x96xf32>
    %15 = arith.addf %11, %14 : vector<8x96xf32>
    %16 = vector.extract_strided_slice %15 {offsets = [0, 0], sizes = [8, 32], strides = [1, 1]} : vector<8x96xf32> to vector<8x32xf32>
    %17 = vector.extract_strided_slice %15 {offsets = [0, 32], sizes = [8, 32], strides = [1, 1]} : vector<8x96xf32> to vector<8x32xf32>
    %18 = vector.extract_strided_slice %15 {offsets = [0, 64], sizes = [8, 32], strides = [1, 1]} : vector<8x96xf32> to vector<8x32xf32>
    %19 = arith.truncf %16 : vector<8x32xf32> to vector<8x32xbf16>
    %20 = vector.shape_cast %19 : vector<8x32xbf16> to vector<8x4x8xbf16>
    %21 = tpu.transpose %20, [1, 0, 2] : vector<8x4x8xbf16> -> vector<4x8x8xbf16>
    %22 = arith.truncf %17 : vector<8x32xf32> to vector<8x32xbf16>
    %23 = vector.shape_cast %22 : vector<8x32xbf16> to vector<8x4x8xbf16>
    %24 = tpu.transpose %23, [1, 0, 2] : vector<8x4x8xbf16> -> vector<4x8x8xbf16>
    %25 = arith.truncf %18 : vector<8x32xf32> to vector<8x32xbf16>
    %26 = vector.shape_cast %25 : vector<8x32xbf16> to vector<8x4x8xbf16>
    %27 = tpu.transpose %26, [1, 0, 2] : vector<8x4x8xbf16> -> vector<4x8x8xbf16>
    "tpu.trace_start"() <{level = 10 : i32, message = "hqd,hkd->hqk"}> : () -> ()
    %cst_11 = arith.constant dense<0.000000e+00> : vector<4x8x8xf32>
    %28 = tpu.matmul %21, %24, %cst_11 {dimension_numbers = #tpu.dot_dimension_numbers<[2], [2], [1], [1], [0, 0, 0, 1, 1, 1], [0], [0]>} : vector<4x8x8xbf16>, vector<4x8x8xbf16>, vector<4x8x8xf32> -> vector<4x8x8xf32>
    "tpu.trace_stop"() : () -> ()
    %29 = vector.shape_cast %7 : vector<1x8xf32> to vector<1x1x8xf32>
    %30 = vector.broadcast %29 : vector<1x1x8xf32> to vector<4x8x8xf32>
    %31 = arith.addf %28, %30 : vector<4x8x8xf32>
    %cst_12 = arith.constant dense<0xFF800000> : vector<4x8xf32>
    %32 = vector.multi_reduction <maximumf>, %31, %cst_12 [2] : vector<4x8x8xf32> to vector<4x8xf32>
    %33 = vector.shape_cast %32 : vector<4x8xf32> to vector<4x8x1xf32>
    %34 = vector.broadcast %33 : vector<4x8x1xf32> to vector<4x8x8xf32>
    %35 = arith.subf %31, %34 : vector<4x8x8xf32>
    %36 = math.exp %35 : vector<4x8x8xf32>
    %cst_13 = arith.constant dense<0.000000e+00> : vector<4x8xf32>
    %37 = vector.multi_reduction <add>, %36, %cst_13 [2] : vector<4x8x8xf32> to vector<4x8xf32>
    %38 = vector.shape_cast %37 : vector<4x8xf32> to vector<4x8x1xf32>
    %39 = tpu.reciprocal %38 {approx = true} : vector<4x8x1xf32> -> vector<4x8x1xf32>
    %40 = vector.broadcast %39 : vector<4x8x1xf32> to vector<4x8x8xf32>
    %41 = arith.mulf %36, %40 : vector<4x8x8xf32>
    %42 = arith.truncf %41 : vector<4x8x8xf32> to vector<4x8x8xbf16>
    "tpu.trace_start"() <{level = 10 : i32, message = "hqk,hkd->hqd"}> : () -> ()
    %cst_14 = arith.constant dense<0.000000e+00> : vector<4x8x8xf32>
    %43 = tpu.matmul %42, %27, %cst_14 {dimension_numbers = #tpu.dot_dimension_numbers<[2], [1], [1], [2], [0, 0, 0, 1, 1, 2], [0], [0]>} : vector<4x8x8xbf16>, vector<4x8x8xbf16>, vector<4x8x8xf32> -> vector<4x8x8xf32>
    "tpu.trace_stop"() : () -> ()
    %44 = tpu.transpose %43, [1, 0, 2] : vector<4x8x8xf32> -> vector<8x4x8xf32>
    %45 = vector.shape_cast %44 : vector<8x4x8xf32> to vector<8x32xf32>
    %46 = arith.truncf %45 : vector<8x32xf32> to vector<8x32xbf16>
    %c0_15 = arith.constant 0 : index
    %c0_16 = arith.constant 0 : index
    %c0_17 = arith.constant 0 : index
    %47 = vector.load %arg6[%c0_15, %c0_16, %c0_17] : memref<1x32x32xbf16, #tpu.memory_space<vmem>>, vector<1x32x32xbf16>
    %48 = vector.shape_cast %47 : vector<1x32x32xbf16> to vector<32x32xbf16>
    %cst_18 = arith.constant dense<0.000000e+00> : vector<8x32xf32>
    %49 = tpu.matmul %46, %48, %cst_18 {dimension_numbers = #tpu.dot_dimension_numbers<[1], [0], [0], [1], [0, 0, 1, 1], [], []>} : vector<8x32xbf16>, vector<32x32xbf16>, vector<8x32xf32> -> vector<8x32xf32>
    %c0_19 = arith.constant 0 : index
    %c0_20 = arith.constant 0 : index
    %c0_21 = arith.constant 0 : index
    %50 = vector.load %arg7[%c0_19, %c0_20, %c0_21] : memref<1x1x32xf32, #tpu.memory_space<vmem>>, vector<1x1x32xf32>
    %51 = vector.shape_cast %50 : vector<1x1x32xf32> to vector<1x32xf32>
    %52 = vector.broadcast %51 : vector<1x32xf32> to vector<8x32xf32>
    %53 = arith.addf %49, %52 : vector<8x32xf32>
    %54 = arith.addf %53, %5 : vector<8x32xf32>
    %c0_22 = arith.constant 0 : index
    %c0_23 = arith.constant 0 : index
    %c0_24 = arith.constant 0 : index
    %55 = vector.load %arg8[%c0_22, %c0_23, %c0_24] : memref<1x1x32xf32, #tpu.memory_space<vmem>>, vector<1x1x32xf32>
    %56 = vector.shape_cast %55 : vector<1x1x32xf32> to vector<1x32xf32>
    %c0_25 = arith.constant 0 : index
    %c0_26 = arith.constant 0 : index
    %c0_27 = arith.constant 0 : index
    %57 = vector.load %arg9[%c0_25, %c0_26, %c0_27] : memref<1x1x32xf32, #tpu.memory_space<vmem>>, vector<1x1x32xf32>
    %58 = vector.shape_cast %57 : vector<1x1x32xf32> to vector<1x32xf32>
    %cst_28 = arith.constant dense<0.000000e+00> : vector<8xf32>
    %59 = vector.multi_reduction <add>, %54, %cst_28 [1] : vector<8x32xf32> to vector<8xf32>
    %60 = vector.shape_cast %59 : vector<8xf32> to vector<8x1xf32>
    %cst_29 = arith.constant 3.200000e+01 : f32
    %61 = vector.broadcast %cst_29 : f32 to vector<8x1xf32>
    %62 = arith.divf %60, %61 : vector<8x1xf32>
    %63 = vector.broadcast %62 : vector<8x1xf32> to vector<8x32xf32>
    %64 = arith.subf %54, %63 : vector<8x32xf32>
    %65 = arith.mulf %64, %64 : vector<8x32xf32>
    %cst_30 = arith.constant dense<0.000000e+00> : vector<8xf32>
    %66 = vector.multi_reduction <add>, %65, %cst_30 [1] : vector<8x32xf32> to vector<8xf32>
    %67 = vector.shape_cast %66 : vector<8xf32> to vector<8x1xf32>
    %cst_31 = arith.constant 3.200000e+01 : f32
    %68 = vector.broadcast %cst_31 : f32 to vector<8x1xf32>
    %69 = arith.divf %67, %68 : vector<8x1xf32>
    %70 = vector.broadcast %62 : vector<8x1xf32> to vector<8x32xf32>
    %71 = arith.subf %54, %70 : vector<8x32xf32>
    %cst_32 = arith.constant 9.99999996E-13 : f32
    %72 = vector.broadcast %cst_32 : f32 to vector<8x1xf32>
    %73 = arith.addf %69, %72 : vector<8x1xf32>
    %74 = math.sqrt %73 : vector<8x1xf32>
    %75 = vector.broadcast %74 : vector<8x1xf32> to vector<8x32xf32>
    %76 = arith.divf %71, %75 : vector<8x32xf32>
    %77 = vector.broadcast %56 : vector<1x32xf32> to vector<8x32xf32>
    %78 = arith.mulf %77, %76 : vector<8x32xf32>
    %79 = vector.broadcast %58 : vector<1x32xf32> to vector<8x32xf32>
    %80 = arith.addf %78, %79 : vector<8x32xf32>
    %81 = arith.truncf %80 : vector<8x32xf32> to vector<8x32xbf16>
    %c0_33 = arith.constant 0 : index
    %c0_34 = arith.constant 0 : index
    %c0_35 = arith.constant 0 : index
    %82 = vector.load %arg10[%c0_33, %c0_34, %c0_35] : memref<1x32x64xbf16, #tpu.memory_space<vmem>>, vector<1x32x64xbf16>
    %83 = vector.shape_cast %82 : vector<1x32x64xbf16> to vector<32x64xbf16>
    %cst_36 = arith.constant dense<0.000000e+00> : vector<8x64xf32>
    %84 = tpu.matmul %81, %83, %cst_36 {dimension_numbers = #tpu.dot_dimension_numbers<[1], [0], [0], [1], [0, 0, 1, 1], [], []>} : vector<8x32xbf16>, vector<32x64xbf16>, vector<8x64xf32> -> vector<8x64xf32>
    %c0_37 = arith.constant 0 : index
    %c0_38 = arith.constant 0 : index
    %c0_39 = arith.constant 0 : index
    %85 = vector.load %arg11[%c0_37, %c0_38, %c0_39] : memref<1x1x64xf32, #tpu.memory_space<vmem>>, vector<1x1x64xf32>
    %86 = vector.shape_cast %85 : vector<1x1x64xf32> to vector<1x64xf32>
    %87 = vector.broadcast %86 : vector<1x64xf32> to vector<8x64xf32>
    %88 = arith.addf %84, %87 : vector<8x64xf32>
    %cst_40 = arith.constant 0.000000e+00 : f32
    %89 = vector.broadcast %cst_40 : f32 to vector<8x64xf32>
    %90 = arith.maximumf %88, %89 : vector<8x64xf32>
    %91 = arith.truncf %90 : vector<8x64xf32> to vector<8x64xbf16>
    %c0_41 = arith.constant 0 : index
    %c0_42 = arith.constant 0 : index
    %c0_43 = arith.constant 0 : index
    %92 = vector.load %arg12[%c0_41, %c0_42, %c0_43] : memref<1x64x32xbf16, #tpu.memory_space<vmem>>, vector<1x64x32xbf16>
    %93 = vector.shape_cast %92 : vector<1x64x32xbf16> to vector<64x32xbf16>
    %cst_44 = arith.constant dense<0.000000e+00> : vector<8x32xf32>
    %94 = tpu.matmul %91, %93, %cst_44 {dimension_numbers = #tpu.dot_dimension_numbers<[1], [0], [0], [1], [0, 0, 1, 1], [], []>} : vector<8x64xbf16>, vector<64x32xbf16>, vector<8x32xf32> -> vector<8x32xf32>
    %c0_45 = arith.constant 0 : index
    %c0_46 = arith.constant 0 : index
    %c0_47 = arith.constant 0 : index
    %95 = vector.load %arg13[%c0_45, %c0_46, %c0_47] : memref<1x1x32xf32, #tpu.memory_space<vmem>>, vector<1x1x32xf32>
    %96 = vector.shape_cast %95 : vector<1x1x32xf32> to vector<1x32xf32>
    %97 = vector.broadcast %96 : vector<1x32xf32> to vector<8x32xf32>
    %98 = arith.addf %94, %97 : vector<8x32xf32>
    %99 = arith.addf %98, %80 : vector<8x32xf32>
    %c0_48 = arith.constant 0 : index
    %c0_49 = arith.constant 0 : index
    %c0_50 = arith.constant 0 : index
    %100 = vector.load %arg14[%c0_48, %c0_49, %c0_50] : memref<1x1x32xf32, #tpu.memory_space<vmem>>, vector<1x1x32xf32>
    %101 = vector.shape_cast %100 : vector<1x1x32xf32> to vector<1x32xf32>
    %c0_51 = arith.constant 0 : index
    %c0_52 = arith.constant 0 : index
    %c0_53 = arith.constant 0 : index
    %102 = vector.load %arg15[%c0_51, %c0_52, %c0_53] : memref<1x1x32xf32, #tpu.memory_space<vmem>>, vector<1x1x32xf32>
    %103 = vector.shape_cast %102 : vector<1x1x32xf32> to vector<1x32xf32>
    %cst_54 = arith.constant dense<0.000000e+00> : vector<8xf32>
    %104 = vector.multi_reduction <add>, %99, %cst_54 [1] : vector<8x32xf32> to vector<8xf32>
    %105 = vector.shape_cast %104 : vector<8xf32> to vector<8x1xf32>
    %cst_55 = arith.constant 3.200000e+01 : f32
    %106 = vector.broadcast %cst_55 : f32 to vector<8x1xf32>
    %107 = arith.divf %105, %106 : vector<8x1xf32>
    %108 = vector.broadcast %107 : vector<8x1xf32> to vector<8x32xf32>
    %109 = arith.subf %99, %108 : vector<8x32xf32>
    %110 = arith.mulf %109, %109 : vector<8x32xf32>
    %cst_56 = arith.constant dense<0.000000e+00> : vector<8xf32>
    %111 = vector.multi_reduction <add>, %110, %cst_56 [1] : vector<8x32xf32> to vector<8xf32>
    %112 = vector.shape_cast %111 : vector<8xf32> to vector<8x1xf32>
    %cst_57 = arith.constant 3.200000e+01 : f32
    %113 = vector.broadcast %cst_57 : f32 to vector<8x1xf32>
    %114 = arith.divf %112, %113 : vector<8x1xf32>
    %115 = vector.broadcast %107 : vector<8x1xf32> to vector<8x32xf32>
    %116 = arith.subf %99, %115 : vector<8x32xf32>
    %cst_58 = arith.constant 9.99999996E-13 : f32
    %117 = vector.broadcast %cst_58 : f32 to vector<8x1xf32>
    %118 = arith.addf %114, %117 : vector<8x1xf32>
    %119 = math.sqrt %118 : vector<8x1xf32>
    %120 = vector.broadcast %119 : vector<8x1xf32> to vector<8x32xf32>
    %121 = arith.divf %116, %120 : vector<8x32xf32>
    %122 = vector.broadcast %101 : vector<1x32xf32> to vector<8x32xf32>
    %123 = arith.mulf %122, %121 : vector<8x32xf32>
    %124 = vector.broadcast %103 : vector<1x32xf32> to vector<8x32xf32>
    %125 = arith.addf %123, %124 : vector<8x32xf32>
    %126 = arith.index_cast %arg1 : i32 to index
    %c0_59 = arith.constant 0 : index
    %c0_60 = arith.constant 0 : index
    %127 = vector.load %arg17[%126, %c0_59, %c0_60] : memref<2x8x32xf32, #tpu.memory_space<vmem>>, vector<1x8x32xf32>
    %128 = vector.shape_cast %127 : vector<1x8x32xf32> to vector<8x32xf32>
    %129 = vector.shape_cast %125 : vector<8x32xf32> to vector<1x8x32xf32>
    tpu.vector_store %arg17[%126, %c0_59, %c0_60], %129 {strides = array<i32>} : memref<2x8x32xf32, #tpu.memory_space<vmem>>, vector<1x8x32xf32>,
    %c0_61 = arith.constant 0 : index
    %c0_62 = arith.constant 0 : index
    %c0_63 = arith.constant 0 : index
    %130 = vector.load %arg16[%c0_61, %c0_62, %c0_63] : memref<1x8x32xf32, #tpu.memory_space<vmem>>, vector<1x8x32xf32>
    %131 = vector.shape_cast %130 : vector<1x8x32xf32> to vector<8x32xf32>
    %132 = vector.shape_cast %125 : vector<8x32xf32> to vector<1x8x32xf32>
    tpu.vector_store %arg16[%c0_61, %c0_62, %c0_63], %132 {strides = array<i32>} : memref<1x8x32xf32, #tpu.memory_space<vmem>>, vector<1x8x32xf32>,
    return
  }
  func.func @transform_0(%arg0: i32, %arg1: i32) -> (i32, i32, i32) {
    %c0_i32 = arith.constant 0 : i32
    %c0_i32_0 = arith.constant 0 : i32
    %c0_i32_1 = arith.constant 0 : i32
    return %arg1, %c0_i32, %c0_i32_0 : i32, i32, i32
  }
  func.func @transform_1(%arg0: i32, %arg1: i32) -> (i32, i32, i32) {
    %c0_i32 = arith.constant 0 : i32
    %c0_i32_0 = arith.constant 0 : i32
    %c0_i32_1 = arith.constant 0 : i32
    return %arg1, %c0_i32, %c0_i32_0 : i32, i32, i32
  }
  func.func @transform_2(%arg0: i32, %arg1: i32) -> (i32, i32, i32) {
    %c0_i32 = arith.constant 0 : i32
    %c0_i32_0 = arith.constant 0 : i32
    %c0_i32_1 = arith.constant 0 : i32
    return %arg0, %c0_i32, %c0_i32_0 : i32, i32, i32
  }
  func.func @transform_3(%arg0: i32, %arg1: i32) -> (i32, i32, i32) {
    %c0_i32 = arith.constant 0 : i32
    %c0_i32_0 = arith.constant 0 : i32
    %c0_i32_1 = arith.constant 0 : i32
    return %arg0, %c0_i32, %c0_i32_0 : i32, i32, i32
  }
  func.func @transform_4(%arg0: i32, %arg1: i32) -> (i32, i32, i32) {
    %c0_i32 = arith.constant 0 : i32
    %c0_i32_0 = arith.constant 0 : i32
    %c0_i32_1 = arith.constant 0 : i32
    return %arg0, %c0_i32, %c0_i32_0 : i32, i32, i32
  }
  func.func @transform_5(%arg0: i32, %arg1: i32) -> (i32, i32, i32) {
    %c0_i32 = arith.constant 0 : i32
    %c0_i32_0 = arith.constant 0 : i32
    %c0_i32_1 = arith.constant 0 : i32
    return %arg0, %c0_i32, %c0_i32_0 : i32, i32, i32
  }
  func.func @transform_6(%arg0: i32, %arg1: i32) -> (i32, i32, i32) {
    %c0_i32 = arith.constant 0 : i32
    %c0_i32_0 = arith.constant 0 : i32
    %c0_i32_1 = arith.constant 0 : i32
    return %arg0, %c0_i32, %c0_i32_0 : i32, i32, i32
  }
  func.func @transform_7(%arg0: i32, %arg1: i32) -> (i32, i32, i32) {
    %c0_i32 = arith.constant 0 : i32
    %c0_i32_0 = arith.constant 0 : i32
    %c0_i32_1 = arith.constant 0 : i32
    return %arg0, %c0_i32, %c0_i32_0 : i32, i32, i32
  }
  func.func @transform_8(%arg0: i32, %arg1: i32) -> (i32, i32, i32) {
    %c0_i32 = arith.constant 0 : i32
    %c0_i32_0 = arith.constant 0 : i32
    %c0_i32_1 = arith.constant 0 : i32
    return %arg0, %c0_i32, %c0_i32_0 : i32, i32, i32
  }
  func.func @transform_9(%arg0: i32, %arg1: i32) -> (i32, i32, i32) {
    %c0_i32 = arith.constant 0 : i32
    %c0_i32_0 = arith.constant 0 : i32
    %c0_i32_1 = arith.constant 0 : i32
    return %arg0, %c0_i32, %c0_i32_0 : i32, i32, i32
  }
  func.func @transform_10(%arg0: i32, %arg1: i32) -> (i32, i32, i32) {
    %c0_i32 = arith.constant 0 : i32
    %c0_i32_0 = arith.constant 0 : i32
    %c0_i32_1 = arith.constant 0 : i32
    return %arg0, %c0_i32, %c0_i32_0 : i32, i32, i32
  }
  func.func @transform_11(%arg0: i32, %arg1: i32) -> (i32, i32, i32) {
    %c0_i32 = arith.constant 0 : i32
    %c0_i32_0 = arith.constant 0 : i32
    %c0_i32_1 = arith.constant 0 : i32
    return %arg0, %c0_i32, %c0_i32_0 : i32, i32, i32
  }
  func.func @transform_12(%arg0: i32, %arg1: i32) -> (i32, i32, i32) {
    %c0_i32 = arith.constant 0 : i32
    %c0_i32_0 = arith.constant 0 : i32
    %c0_i32_1 = arith.constant 0 : i32
    return %arg0, %c0_i32, %c0_i32_0 : i32, i32, i32
  }
  func.func @transform_13(%arg0: i32, %arg1: i32) -> (i32, i32, i32) {
    %c0_i32 = arith.constant 0 : i32
    %c0_i32_0 = arith.constant 0 : i32
    %c0_i32_1 = arith.constant 0 : i32
    return %arg0, %c0_i32, %c0_i32_0 : i32, i32, i32
  }
  func.func @transform_14(%arg0: i32, %arg1: i32) -> (i32, i32, i32) {
    %c0_i32 = arith.constant 0 : i32
    %c0_i32_0 = arith.constant 0 : i32
    %c0_i32_1 = arith.constant 0 : i32
    return %arg1, %c0_i32, %c0_i32_0 : i32, i32, i32
  }
}

</mosaic_0001>

<llo_original>
// kernel: tpu_custom_call.1
$region0: #{tpu_custom_call.1}
  #allocation0 [shape = 'u32[]', space=smem, size = 0x4, offset = 0x4, fixed_abs, tag = 'smem constant byte address 0x4 - core index']
  #allocation1 [shape = 'u32[144,128]{1,0:T(1,128)}', space=vmem, size = 0x12000, scoped, tag = 'internal scratch']
  #allocation2 [shape = 'f32[2,8,32]{2,1,0:T(8,128)}', space=vmem, size = 0x2000, scoped, tag = 'scratch operand']
  %s0 = inlined_call_operand.hbm [shape: f32[2,8,32], index: 0, kind: input, shape index: {}]
  %s1 = inlined_call_operand.hbm [shape: f32[2,1,8], index: 1, kind: input, shape index: {}]
  %s2 = inlined_call_operand.vmem [shape: bf16[2,32,96], index: 2, kind: input, shape index: {}]
  %s3 = inlined_call_operand.vmem [shape: f32[2,1,96], index: 3, kind: input, shape index: {}]
  %s4 = inlined_call_operand.vmem [shape: bf16[2,32,32], index: 4, kind: input, shape index: {}]
  %s5 = inlined_call_operand.vmem [shape: f32[2,1,32], index: 5, kind: input, shape index: {}]
  %s6 = inlined_call_operand.vmem [shape: f32[2,1,32], index: 6, kind: input, shape index: {}]
  %s7 = inlined_call_operand.vmem [shape: f32[2,1,32], index: 7, kind: input, shape index: {}]
  %s8 = inlined_call_operand.vmem [shape: bf16[2,32,64], index: 8, kind: input, shape index: {}]
  %s9 = inlined_call_operand.vmem [shape: f32[2,1,64], index: 9, kind: input, shape index: {}]
  %s10 = inlined_call_operand.vmem [shape: bf16[2,64,32], index: 10, kind: input, shape index: {}]
  %s11 = inlined_call_operand.vmem [shape: f32[2,1,32], index: 11, kind: input, shape index: {}]
  %s12 = inlined_call_operand.vmem [shape: f32[2,1,32], index: 12, kind: input, shape index: {}]
  %s13 = inlined_call_operand.vmem [shape: f32[2,1,32], index: 13, kind: input, shape index: {}]
  %s14 = inlined_call_operand.hbm [shape: f32[2,8,32], index: 14, kind: output, shape index: {}]
  %s15 = sld [smem:[#allocation0]]
  $region101: #{tpu_custom_call.1} parent=0
    _
  %s17 = ssub.s32 1, %s15
  %s18 = scalar_select 0, %s17, %s15
  $region1: #{tpu_custom_call.1} parent=0
    #allocation3 [shape = 'u8[8192]{0}', space=vmem, size = 0x2000, scoped, tag = 'input window, operand 0']
    #allocation4 [shape = 's32[2]{0}', space=sflag, size = 0x8, scoped, tag = 'scoped memory for tpu_custom_call.1']
    #allocation5 [shape = 's32[2]{0}', space=sflag, size = 0x8, scoped, tag = 'scoped memory for tpu_custom_call.1']
    #allocation6 [shape = 'u8[1024]{0}', space=vmem, size = 0x400, scoped, tag = 'input window, operand 1']
    #allocation7 [shape = 's32[2]{0}', space=sflag, size = 0x8, scoped, tag = 'scoped memory for tpu_custom_call.1']
    #allocation8 [shape = 'u8[8192]{0}', space=vmem, size = 0x2000, scoped, tag = 'output window, operand 0']
    %19 = vsyncpa [#allocation4], 0
    %s20 = scalar_lea.sflag [#allocation4], 1
    %21 = vsyncpa %s20, 0
    %22 = vsyncpa [#allocation7], 0
    %s23 = scalar_lea.sflag [#allocation7], 1
    %24 = vsyncpa %s23, 0
    %25 = vsyncpa [#allocation5], 0
    %s26 = scalar_lea.sflag [#allocation5], 1
    %27 = vsyncpa %s26, 0
    loop: start=0, step=1, limit=6
    $region2: #{tpu_custom_call.1} parent=1 // loop_pre_header
      _
    $region3: #{tpu_custom_call.1} parent=1 // loop_header
      %s29 = sphi 0, %s33
      %p30 = scmp.ge.s32.totalorder %s29, 6
      %s36 = sphi 0, %s48
      %s37 = sphi 0, %s44
      %s38 = sphi 0, %s36
      %s39 = sphi 0, %s37
      %s40 = sphi 0, %s38
      %s41 = sphi 0, %s39
      %s51 = sphi 0, %s53
      %s54 = sphi 0, %s51
      %s55 = sphi 0, %s54
      %s71 = sphi 0, %s55
      %s77 = sphi 0, %s79
      %s80 = sphi 0, %s77
      %s81 = sphi 0, %s80
      %s97 = sphi 0, %s81
      %s103 = sphi 0, %s105
      %s106 = sphi 0, %s103
      %s107 = sphi 0, %s106
      %s123 = sphi 0, %s107
      %s129 = sphi 0, %s131
      %s132 = sphi 0, %s129
      %s133 = sphi 0, %s132
      %s149 = sphi 0, %s133
      %s155 = sphi 0, %s157
      %s158 = sphi 0, %s155
      %s159 = sphi 0, %s158
      %s175 = sphi 0, %s159
      %s181 = sphi 0, %s183
      %s184 = sphi 0, %s181
      %s185 = sphi 0, %s184
      %s201 = sphi 0, %s185
      %s207 = sphi 0, %s209
      %s210 = sphi 0, %s207
      %s211 = sphi 0, %s210
      %s227 = sphi 0, %s211
      %s233 = sphi 0, %s235
      %s236 = sphi 0, %s233
      %s237 = sphi 0, %s236
      %s253 = sphi 0, %s237
      %s259 = sphi 0, %s261
      %s262 = sphi 0, %s259
      %s263 = sphi 0, %s262
      %s279 = sphi 0, %s263
      %s285 = sphi 0, %s287
      %s288 = sphi 0, %s285
      %s289 = sphi 0, %s288
      %s305 = sphi 0, %s289
      %s311 = sphi 0, %s313
      %s314 = sphi 0, %s311
      %s315 = sphi 0, %s314
      %s331 = sphi 0, %s315
      %s337 = sphi 0, %s339
      %s340 = sphi 0, %s337
      %s341 = sphi 0, %s340
      %s357 = sphi 0, %s341
      %s363 = sphi 0, %s365
      %s366 = sphi 0, %s363
      %s367 = sphi 0, %s366
      %s383 = sphi 0, %s367
      %s389 = sphi 0, %s391
      %s392 = sphi 0, %s389
      %s393 = sphi 0, %s392
      %s409 = sphi 0, %s393
      %s415 = sphi 0, %s417
      %s418 = sphi 0, %s415
      %s419 = sphi 0, %s418
      %s435 = sphi 0, %s419
    $region4: #{tpu_custom_call.1} parent=1 // loop_header_branch
      %32 = sbr.rel (%p30) target = $region8
    $region5: #{tpu_custom_call.1} parent=1 // loop_body
      %s34 = ssub.s32 %s29, 1
      %s35 = ssub.s32 %s29, 2
      %s42 = sadd.s32 1, %s37
      %p43 = scmp.ge.s32.totalorder %s42, 2
      %s44 = scalar_select %p43, 0, %s42
      %s45 = sadd.s32 1, %s36
      %s46 = scalar_select %p43, %s45, %s36
      %p47 = scmp.ge.s32.totalorder %s46, 2
      %s48 = scalar_select %p47, 0, %s46
      %s49 = ssub.s32 %s37, %s44
      %p50 = scmp.eq.s32.totalorder %s49, 0
      %s52 = sadd.s32 %s51, 1
      %s53 = scalar_select %p50, %s51, %s52
      %p56 = pneg %p50
      %p57 = scmp.eq.s32.totalorder %s29, 3
      %p58 = por %p56, %p57
      %p59 = scmp.ne.s32.totalorder %s51, %s54
      %p60 = scmp.eq.s32.totalorder %s29, 0
      %p61 = por %p59, %p60
      %p62 = scmp.ne.s32.totalorder %s51, %s54
      %p63 = scmp.eq.s32.totalorder %s34, 3
      %p64 = por %p62, %p63
      %p65 = scmp.ne.s32.totalorder %s54, %s55
      %p66 = scmp.eq.s32.totalorder %s34, 0
      %p67 = por %p65, %p66
      %p68 = scmp.ne.s32.totalorder %s54, %s55
      %p69 = scmp.eq.s32.totalorder %s35, 3
      %p70 = por %p68, %p69
      %p72 = scmp.ne.s32.totalorder %s55, %s71
      %p73 = scmp.eq.s32.totalorder %s35, 0
      %p74 = por %p72, %p73
      %s75 = ssub.s32 %s37, %s44
      %p76 = scmp.eq.s32.totalorder %s75, 0
      %s78 = sadd.s32 %s77, 1
      %s79 = scalar_select %p76, %s77, %s78
      %p82 = pneg %p76
      %p83 = scmp.eq.s32.totalorder %s29, 3
      %p84 = por %p82, %p83
      %p85 = scmp.ne.s32.totalorder %s77, %s80
      %p86 = scmp.eq.s32.totalorder %s29, 0
      %p87 = por %p85, %p86
      %p88 = scmp.ne.s32.totalorder %s77, %s80
      %p89 = scmp.eq.s32.totalorder %s34, 3
      %p90 = por %p88, %p89
      %p91 = scmp.ne.s32.totalorder %s80, %s81
      %p92 = scmp.eq.s32.totalorder %s34, 0
      %p93 = por %p91, %p92
      %p94 = scmp.ne.s32.totalorder %s80, %s81
      %p95 = scmp.eq.s32.totalorder %s35, 3
      %p96 = por %p94, %p95
      %p98 = scmp.ne.s32.totalorder %s81, %s97
      %p99 = scmp.eq.s32.totalorder %s35, 0
      %p100 = por %p98, %p99
      %s101 = ssub.s32 %s36, %s48
      %p102 = scmp.eq.s32.totalorder %s101, 0
      %s104 = sadd.s32 %s103, 1
      %s105 = scalar_select %p102, %s103, %s104
      %p108 = pneg %p102
      %p109 = scmp.eq.s32.totalorder %s29, 3
      %p110 = por %p108, %p109
      %p111 = scmp.ne.s32.totalorder %s103, %s106
      %p112 = scmp.eq.s32.totalorder %s29, 0
      %p113 = por %p111, %p112
      %p114 = scmp.ne.s32.totalorder %s103, %s106
      %p115 = scmp.eq.s32.totalorder %s34, 3
      %p116 = por %p114, %p115
      %p117 = scmp.ne.s32.totalorder %s106, %s107
      %p118 = scmp.eq.s32.totalorder %s34, 0
      %p119 = por %p117, %p118
      %p120 = scmp.ne.s32.totalorder %s106, %s107
      %p121 = scmp.eq.s32.totalorder %s35, 3
      %p122 = por %p120, %p121
      %p124 = scmp.ne.s32.totalorder %s107, %s123
      %p125 = scmp.eq.s32.totalorder %s35, 0
      %p126 = por %p124, %p125
      %s127 = ssub.s32 %s36, %s48
      %p128 = scmp.eq.s32.totalorder %s127, 0
      %s130 = sadd.s32 %s129, 1
      %s131 = scalar_select %p128, %s129, %s130
      %p134 = pneg %p128
      %p135 = scmp.eq.s32.totalorder %s29, 3
      %p136 = por %p134, %p135
      %p137 = scmp.ne.s32.totalorder %s129, %s132
      %p138 = scmp.eq.s32.totalorder %s29, 0
      %p139 = por %p137, %p138
      %p140 = scmp.ne.s32.totalorder %s129, %s132
      %p141 = scmp.eq.s32.totalorder %s34, 3
      %p142 = por %p140, %p141
      %p143 = scmp.ne.s32.totalorder %s132, %s133
      %p144 = scmp.eq.s32.totalorder %s34, 0
      %p145 = por %p143, %p144
      %p146 = scmp.ne.s32.totalorder %s132, %s133
      %p147 = scmp.eq.s32.totalorder %s35, 3
      %p148 = por %p146, %p147
      %p150 = scmp.ne.s32.totalorder %s133, %s149
      %p151 = scmp.eq.s32.totalorder %s35, 0
      %p152 = por %p150, %p151
      %s153 = ssub.s32 %s36, %s48
      %p154 = scmp.eq.s32.totalorder %s153, 0
      %s156 = sadd.s32 %s155, 1
      %s157 = scalar_select %p154, %s155, %s156
      %p160 = pneg %p154
      %p161 = scmp.eq.s32.totalorder %s29, 3
      %p162 = por %p160, %p161
      %p163 = scmp.ne.s32.totalorder %s155, %s158
      %p164 = scmp.eq.s32.totalorder %s29, 0
      %p165 = por %p163, %p164
      %p166 = scmp.ne.s32.totalorder %s155, %s158
      %p167 = scmp.eq.s32.totalorder %s34, 3
      %p168 = por %p166, %p167
      %p169 = scmp.ne.s32.totalorder %s158, %s159
      %p170 = scmp.eq.s32.totalorder %s34, 0
      %p171 = por %p169, %p170
      %p172 = scmp.ne.s32.totalorder %s158, %s159
      %p173 = scmp.eq.s32.totalorder %s35, 3
      %p174 = por %p172, %p173
      %p176 = scmp.ne.s32.totalorder %s159, %s175
      %p177 = scmp.eq.s32.totalorder %s35, 0
      %p178 = por %p176, %p177
      %s179 = ssub.s32 %s36, %s48
      %p180 = scmp.eq.s32.totalorder %s179, 0
      %s182 = sadd.s32 %s181, 1
      %s183 = scalar_select %p180, %s181, %s182
      %p186 = pneg %p180
      %p187 = scmp.eq.s32.totalorder %s29, 3
      %p188 = por %p186, %p187
      %p189 = scmp.ne.s32.totalorder %s181, %s184
      %p190 = scmp.eq.s32.totalorder %s29, 0
      %p191 = por %p189, %p190
      %p192 = scmp.ne.s32.totalorder %s181, %s184
      %p193 = scmp.eq.s32.totalorder %s34, 3
      %p194 = por %p192, %p193
      %p195 = scmp.ne.s32.totalorder %s184, %s185
      %p196 = scmp.eq.s32.totalorder %s34, 0
      %p197 = por %p195, %p196
      %p198 = scmp.ne.s32.totalorder %s184, %s185
      %p199 = scmp.eq.s32.totalorder %s35, 3
      %p200 = por %p198, %p199
      %p202 = scmp.ne.s32.totalorder %s185, %s201
      %p203 = scmp.eq.s32.totalorder %s35, 0
      %p204 = por %p202, %p203
      %s205 = ssub.s32 %s36, %s48
      %p206 = scmp.eq.s32.totalorder %s205, 0
      %s208 = sadd.s32 %s207, 1
      %s209 = scalar_select %p206, %s207, %s208
      %p212 = pneg %p206
      %p213 = scmp.eq.s32.totalorder %s29, 3
      %p214 = por %p212, %p213
      %p215 = scmp.ne.s32.totalorder %s207, %s210
      %p216 = scmp.eq.s32.totalorder %s29, 0
      %p217 = por %p215, %p216
      %p218 = scmp.ne.s32.totalorder %s207, %s210
      %p219 = scmp.eq.s32.totalorder %s34, 3
      %p220 = por %p218, %p219
      %p221 = scmp.ne.s32.totalorder %s210, %s211
      %p222 = scmp.eq.s32.totalorder %s34, 0
      %p223 = por %p221, %p222
      %p224 = scmp.ne.s32.totalorder %s210, %s211
      %p225 = scmp.eq.s32.totalorder %s35, 3
      %p226 = por %p224, %p225
      %p228 = scmp.ne.s32.totalorder %s211, %s227
      %p229 = scmp.eq.s32.totalorder %s35, 0
      %p230 = por %p228, %p229
      %s231 = ssub.s32 %s36, %s48
      %p232 = scmp.eq.s32.totalorder %s231, 0
      %s234 = sadd.s32 %s233, 1
      %s235 = scalar_select %p232, %s233, %s234
      %p238 = pneg %p232
      %p239 = scmp.eq.s32.totalorder %s29, 3
      %p240 = por %p238, %p239
      %p241 = scmp.ne.s32.totalorder %s233, %s236
      %p242 = scmp.eq.s32.totalorder %s29, 0
      %p243 = por %p241, %p242
      %p244 = scmp.ne.s32.totalorder %s233, %s236
      %p245 = scmp.eq.s32.totalorder %s34, 3
      %p246 = por %p244, %p245
      %p247 = scmp.ne.s32.totalorder %s236, %s237
      %p248 = scmp.eq.s32.totalorder %s34, 0
      %p249 = por %p247, %p248
      %p250 = scmp.ne.s32.totalorder %s236, %s237
      %p251 = scmp.eq.s32.totalorder %s35, 3
      %p252 = por %p250, %p251
      %p254 = scmp.ne.s32.totalorder %s237, %s253
      %p255 = scmp.eq.s32.totalorder %s35, 0
      %p256 = por %p254, %p255
      %s257 = ssub.s32 %s36, %s48
      %p258 = scmp.eq.s32.totalorder %s257, 0
      %s260 = sadd.s32 %s259, 1
      %s261 = scalar_select %p258, %s259, %s260
      %p264 = pneg %p258
      %p265 = scmp.eq.s32.totalorder %s29, 3
      %p266 = por %p264, %p265
      %p267 = scmp.ne.s32.totalorder %s259, %s262
      %p268 = scmp.eq.s32.totalorder %s29, 0
      %p269 = por %p267, %p268
      %p270 = scmp.ne.s32.totalorder %s259, %s262
      %p271 = scmp.eq.s32.totalorder %s34, 3
      %p272 = por %p270, %p271
      %p273 = scmp.ne.s32.totalorder %s262, %s263
      %p274 = scmp.eq.s32.totalorder %s34, 0
      %p275 = por %p273, %p274
      %p276 = scmp.ne.s32.totalorder %s262, %s263
      %p277 = scmp.eq.s32.totalorder %s35, 3
      %p278 = por %p276, %p277
      %p280 = scmp.ne.s32.totalorder %s263, %s279
      %p281 = scmp.eq.s32.totalorder %s35, 0
      %p282 = por %p280, %p281
      %s283 = ssub.s32 %s36, %s48
      %p284 = scmp.eq.s32.totalorder %s283, 0
      %s286 = sadd.s32 %s285, 1
      %s287 = scalar_select %p284, %s285, %s286
      %p290 = pneg %p284
      %p291 = scmp.eq.s32.totalorder %s29, 3
      %p292 = por %p290, %p291
      %p293 = scmp.ne.s32.totalorder %s285, %s288
      %p294 = scmp.eq.s32.totalorder %s29, 0
      %p295 = por %p293, %p294
      %p296 = scmp.ne.s32.totalorder %s285, %s288
      %p297 = scmp.eq.s32.totalorder %s34, 3
      %p298 = por %p296, %p297
      %p299 = scmp.ne.s32.totalorder %s288, %s289
      %p300 = scmp.eq.s32.totalorder %s34, 0
      %p301 = por %p299, %p300
      %p302 = scmp.ne.s32.totalorder %s288, %s289
      %p303 = scmp.eq.s32.totalorder %s35, 3
      %p304 = por %p302, %p303
      %p306 = scmp.ne.s32.totalorder %s289, %s305
      %p307 = scmp.eq.s32.totalorder %s35, 0
      %p308 = por %p306, %p307
      %s309 = ssub.s32 %s36, %s48
      %p310 = scmp.eq.s32.totalorder %s309, 0
      %s312 = sadd.s32 %s311, 1
      %s313 = scalar_select %p310, %s311, %s312
      %p316 = pneg %p310
      %p317 = scmp.eq.s32.totalorder %s29, 3
      %p318 = por %p316, %p317
      %p319 = scmp.ne.s32.totalorder %s311, %s314
      %p320 = scmp.eq.s32.totalorder %s29, 0
      %p321 = por %p319, %p320
      %p322 = scmp.ne.s32.totalorder %s311, %s314
      %p323 = scmp.eq.s32.totalorder %s34, 3
      %p324 = por %p322, %p323
      %p325 = scmp.ne.s32.totalorder %s314, %s315
      %p326 = scmp.eq.s32.totalorder %s34, 0
      %p327 = por %p325, %p326
      %p328 = scmp.ne.s32.totalorder %s314, %s315
      %p329 = scmp.eq.s32.totalorder %s35, 3
      %p330 = por %p328, %p329
      %p332 = scmp.ne.s32.totalorder %s315, %s331
      %p333 = scmp.eq.s32.totalorder %s35, 0
      %p334 = por %p332, %p333
      %s335 = ssub.s32 %s36, %s48
      %p336 = scmp.eq.s32.totalorder %s335, 0
      %s338 = sadd.s32 %s337, 1
      %s339 = scalar_select %p336, %s337, %s338
      %p342 = pneg %p336
      %p343 = scmp.eq.s32.totalorder %s29, 3
      %p344 = por %p342, %p343
      %p345 = scmp.ne.s32.totalorder %s337, %s340
      %p346 = scmp.eq.s32.totalorder %s29, 0
      %p347 = por %p345, %p346
      %p348 = scmp.ne.s32.totalorder %s337, %s340
      %p349 = scmp.eq.s32.totalorder %s34, 3
      %p350 = por %p348, %p349
      %p351 = scmp.ne.s32.totalorder %s340, %s341
      %p352 = scmp.eq.s32.totalorder %s34, 0
      %p353 = por %p351, %p352
      %p354 = scmp.ne.s32.totalorder %s340, %s341
      %p355 = scmp.eq.s32.totalorder %s35, 3
      %p356 = por %p354, %p355
      %p358 = scmp.ne.s32.totalorder %s341, %s357
      %p359 = scmp.eq.s32.totalorder %s35, 0
      %p360 = por %p358, %p359
      %s361 = ssub.s32 %s36, %s48
      %p362 = scmp.eq.s32.totalorder %s361, 0
      %s364 = sadd.s32 %s363, 1
      %s365 = scalar_select %p362, %s363, %s364
      %p368 = pneg %p362
      %p369 = scmp.eq.s32.totalorder %s29, 3
      %p370 = por %p368, %p369
      %p371 = scmp.ne.s32.totalorder %s363, %s366
      %p372 = scmp.eq.s32.totalorder %s29, 0
      %p373 = por %p371, %p372
      %p374 = scmp.ne.s32.totalorder %s363, %s366
      %p375 = scmp.eq.s32.totalorder %s34, 3
      %p376 = por %p374, %p375
      %p377 = scmp.ne.s32.totalorder %s366, %s367
      %p378 = scmp.eq.s32.totalorder %s34, 0
      %p379 = por %p377, %p378
      %p380 = scmp.ne.s32.totalorder %s366, %s367
      %p381 = scmp.eq.s32.totalorder %s35, 3
      %p382 = por %p380, %p381
      %p384 = scmp.ne.s32.totalorder %s367, %s383
      %p385 = scmp.eq.s32.totalorder %s35, 0
      %p386 = por %p384, %p385
      %s387 = ssub.s32 %s36, %s48
      %p388 = scmp.eq.s32.totalorder %s387, 0
      %s390 = sadd.s32 %s389, 1
      %s391 = scalar_select %p388, %s389, %s390
      %p394 = pneg %p388
      %p395 = scmp.eq.s32.totalorder %s29, 3
      %p396 = por %p394, %p395
      %p397 = scmp.ne.s32.totalorder %s389, %s392
      %p398 = scmp.eq.s32.totalorder %s29, 0
      %p399 = por %p397, %p398
      %p400 = scmp.ne.s32.totalorder %s389, %s392
      %p401 = scmp.eq.s32.totalorder %s34, 3
      %p402 = por %p400, %p401
      %p403 = scmp.ne.s32.totalorder %s392, %s393
      %p404 = scmp.eq.s32.totalorder %s34, 0
      %p405 = por %p403, %p404
      %p406 = scmp.ne.s32.totalorder %s392, %s393
      %p407 = scmp.eq.s32.totalorder %s35, 3
      %p408 = por %p406, %p407
      %p410 = scmp.ne.s32.totalorder %s393, %s409
      %p411 = scmp.eq.s32.totalorder %s35, 0
      %p412 = por %p410, %p411
      %s413 = ssub.s32 %s37, %s44
      %p414 = scmp.eq.s32.totalorder %s413, 0
      %s416 = sadd.s32 %s415, 1
      %s417 = scalar_select %p414, %s415, %s416
      %p420 = pneg %p414
      %p421 = scmp.eq.s32.totalorder %s29, 3
      %p422 = por %p420, %p421
      %p423 = scmp.ne.s32.totalorder %s415, %s418
      %p424 = scmp.eq.s32.totalorder %s29, 0
      %p425 = por %p423, %p424
      %p426 = scmp.ne.s32.totalorder %s415, %s418
      %p427 = scmp.eq.s32.totalorder %s34, 3
      %p428 = por %p426, %p427
      %p429 = scmp.ne.s32.totalorder %s418, %s419
      %p430 = scmp.eq.s32.totalorder %s34, 0
      %p431 = por %p429, %p430
      %p432 = scmp.ne.s32.totalorder %s418, %s419
      %p433 = scmp.eq.s32.totalorder %s35, 3
      %p434 = por %p432, %p433
      %p436 = scmp.ne.s32.totalorder %s419, %s435
      %p437 = scmp.eq.s32.totalorder %s35, 0
      %p438 = por %p436, %p437
      %p439 = scmp.le.s32.totalorder 1, %s29
      %p440 = scmp.lt.s32.totalorder %s29, 5
      %p441 = pnand %p439, %p440
      %p442 = pneg %p441
      // Predicated region
      $region9: #{tpu_custom_call.1} parent=5 // pred_check
        _
      $region10: #{tpu_custom_call.1} parent=5 // pred_check_branch
        %444 = sbr.rel (%p441) target = $region12
      $region11: #{tpu_custom_call.1} parent=5 // pred_region
        %s445 = ssub.s32 %s29, 1
      $region12: #{tpu_custom_call.1} parent=5 // pred_fallthru
        _
      %p446 = scmp.lt.s32.totalorder %s29, 4
      // Predicated region
      $region13: #{tpu_custom_call.1} parent=5 // pred_check
        %p447 = pneg %p446
      $region14: #{tpu_custom_call.1} parent=5 // pred_check_branch
        %449 = sbr.rel (%p447) target = $region16
      $region15: #{tpu_custom_call.1} parent=5 // pred_region
        // Predicated region
        $region17: #{tpu_custom_call.1} parent=15 // pred_check
          %p450 = pneg %p61
        $region18: #{tpu_custom_call.1} parent=15 // pred_check_branch
          %452 = sbr.rel (%p450) target = $region20
        $region19: #{tpu_custom_call.1} parent=15 // pred_region
          %s453 = sand.u32 %s51, 1
          %s454 = scalar_lea.sflag [#allocation4], %s453
          %s455 = sand.u32 %s51, 1
          %s456 = smul.addr %s455, 8
          %s457 = scalar_lea.vmem [#allocation3], %s456
          %s459 = ssub.s32 128, 128
          %460 = vsyncadd %s454, %s459
          %s461 = smul.addr %s37, 128
          %s462 = scalar_lea.hbm %s0, %s461
          %s464 = sshll.u32 %s457, 4
          %s465 = int_to_ptr.vmem [resolvable:$true] %s464
          %467 = dma.hbm_to_vmem [thread:$0]  %s462, 128, %s465, %s454
        $region20: #{tpu_custom_call.1} parent=15 // pred_fallthru
          _
        // Predicated region
        $region21: #{tpu_custom_call.1} parent=15 // pred_check
          %p468 = pneg %p87
        $region22: #{tpu_custom_call.1} parent=15 // pred_check_branch
          %470 = sbr.rel (%p468) target = $region24
        $region23: #{tpu_custom_call.1} parent=15 // pred_region
          %s471 = sand.u32 %s77, 1
          %s472 = scalar_lea.sflag [#allocation7], %s471
          %s473 = sand.u32 %s77, 1
          %s474 = scalar_lea.vmem [#allocation6], %s473
          %s476 = ssub.s32 16, 16
          %477 = vsyncadd %s472, %s476
          %s478 = smul.addr %s37, 16
          %s479 = scalar_lea.hbm %s1, %s478
          %s481 = sshll.u32 %s474, 4
          %s482 = int_to_ptr.vmem [resolvable:$true] %s481
          %484 = dma.hbm_to_vmem [thread:$0]  %s479, 16, %s482, %s472
        $region24: #{tpu_custom_call.1} parent=15 // pred_fallthru
          _
        // Predicated region
        $region25: #{tpu_custom_call.1} parent=15 // pred_check
          %p485 = pneg %p113
        $region26: #{tpu_custom_call.1} parent=15 // pred_check_branch
          %487 = sbr.rel (%p485) target = $region28
        $region27: #{tpu_custom_call.1} parent=15 // pred_region
          %p488 = scmp.lt.s32.totalorder %s36, 1
          %s489 = scalar_select %p488, %s36, 1
          %s490 = smul.addr %s489, 4
          %s491 = smul.addr %s490, 4
          %s492 = scalar_lea.vmem %s2, %s491
        $region28: #{tpu_custom_call.1} parent=15 // pred_fallthru
          _
        // Predicated region
        $region29: #{tpu_custom_call.1} parent=15 // pred_check
          %p493 = pneg %p139
        $region30: #{tpu_custom_call.1} parent=15 // pred_check_branch
          %495 = sbr.rel (%p493) target = $region32
        $region31: #{tpu_custom_call.1} parent=15 // pred_region
          %p496 = scmp.lt.s32.totalorder %s36, 1
          %s497 = scalar_select %p496, %s36, 1
          %s498 = scalar_lea.vmem %s3, %s497
        $region32: #{tpu_custom_call.1} parent=15 // pred_fallthru
          _
        // Predicated region
        $region33: #{tpu_custom_call.1} parent=15 // pred_check
          %p499 = pneg %p165
        $region34: #{tpu_custom_call.1} parent=15 // pred_check_branch
          %501 = sbr.rel (%p499) target = $region36
        $region35: #{tpu_custom_call.1} parent=15 // pred_region
          %p502 = scmp.lt.s32.totalorder %s36, 1
          %s503 = scalar_select %p502, %s36, 1
          %s504 = smul.addr %s503, 4
          %s505 = smul.addr %s504, 4
          %s506 = scalar_lea.vmem %s4, %s505
        $region36: #{tpu_custom_call.1} parent=15 // pred_fallthru
          _
        // Predicated region
        $region37: #{tpu_custom_call.1} parent=15 // pred_check
          %p507 = pneg %p191
        $region38: #{tpu_custom_call.1} parent=15 // pred_check_branch
          %509 = sbr.rel (%p507) target = $region40
        $region39: #{tpu_custom_call.1} parent=15 // pred_region
          %p510 = scmp.lt.s32.totalorder %s36, 1
          %s511 = scalar_select %p510, %s36, 1
          %s512 = scalar_lea.vmem %s5, %s511
        $region40: #{tpu_custom_call.1} parent=15 // pred_fallthru
          _
        // Predicated region
        $region41: #{tpu_custom_call.1} parent=15 // pred_check
          %p513 = pneg %p217
        $region42: #{tpu_custom_call.1} parent=15 // pred_check_branch
          %515 = sbr.rel (%p513) target = $region44
        $region43: #{tpu_custom_call.1} parent=15 // pred_region
          %p516 = scmp.lt.s32.totalorder %s36, 1
          %s517 = scalar_select %p516, %s36, 1
          %s518 = scalar_lea.vmem %s6, %s517
        $region44: #{tpu_custom_call.1} parent=15 // pred_fallthru
          _
        // Predicated region
        $region45: #{tpu_custom_call.1} parent=15 // pred_check
          %p519 = pneg %p243
        $region46: #{tpu_custom_call.1} parent=15 // pred_check_branch
          %521 = sbr.rel (%p519) target = $region48
        $region47: #{tpu_custom_call.1} parent=15 // pred_region
          %p522 = scmp.lt.s32.totalorder %s36, 1
          %s523 = scalar_select %p522, %s36, 1
          %s524 = scalar_lea.vmem %s7, %s523
        $region48: #{tpu_custom_call.1} parent=15 // pred_fallthru
          _
        // Predicated region
        $region49: #{tpu_custom_call.1} parent=15 // pred_check
          %p525 = pneg %p269
        $region50: #{tpu_custom_call.1} parent=15 // pred_check_branch
          %527 = sbr.rel (%p525) target = $region52
        $region51: #{tpu_custom_call.1} parent=15 // pred_region
          %p528 = scmp.lt.s32.totalorder %s36, 1
          %s529 = scalar_select %p528, %s36, 1
          %s530 = smul.addr %s529, 4
          %s531 = smul.addr %s530, 4
          %s532 = scalar_lea.vmem %s8, %s531
        $region52: #{tpu_custom_call.1} parent=15 // pred_fallthru
          _
        // Predicated region
        $region53: #{tpu_custom_call.1} parent=15 // pred_check
          %p533 = pneg %p295
        $region54: #{tpu_custom_call.1} parent=15 // pred_check_branch
          %535 = sbr.rel (%p533) target = $region56
        $region55: #{tpu_custom_call.1} parent=15 // pred_region
          %p536 = scmp.lt.s32.totalorder %s36, 1
          %s537 = scalar_select %p536, %s36, 1
          %s538 = scalar_lea.vmem %s9, %s537
        $region56: #{tpu_custom_call.1} parent=15 // pred_fallthru
          _
        // Predicated region
        $region57: #{tpu_custom_call.1} parent=15 // pred_check
          %p539 = pneg %p321
        $region58: #{tpu_custom_call.1} parent=15 // pred_check_branch
          %541 = sbr.rel (%p539) target = $region60
        $region59: #{tpu_custom_call.1} parent=15 // pred_region
          %p542 = scmp.lt.s32.totalorder %s36, 1
          %s543 = scalar_select %p542, %s36, 1
          %s544 = smul.addr %s543, 8
          %s545 = smul.addr %s544, 4
          %s546 = scalar_lea.vmem %s10, %s545
        $region60: #{tpu_custom_call.1} parent=15 // pred_fallthru
          _
        // Predicated region
        $region61: #{tpu_custom_call.1} parent=15 // pred_check
          %p547 = pneg %p347
        $region62: #{tpu_custom_call.1} parent=15 // pred_check_branch
          %549 = sbr.rel (%p547) target = $region64
        $region63: #{tpu_custom_call.1} parent=15 // pred_region
          %p550 = scmp.lt.s32.totalorder %s36, 1
          %s551 = scalar_select %p550, %s36, 1
          %s552 = scalar_lea.vmem %s11, %s551
        $region64: #{tpu_custom_call.1} parent=15 // pred_fallthru
          _
        // Predicated region
        $region65: #{tpu_custom_call.1} parent=15 // pred_check
          %p553 = pneg %p373
        $region66: #{tpu_custom_call.1} parent=15 // pred_check_branch
          %555 = sbr.rel (%p553) target = $region68
        $region67: #{tpu_custom_call.1} parent=15 // pred_region
          %p556 = scmp.lt.s32.totalorder %s36, 1
          %s557 = scalar_select %p556, %s36, 1
          %s558 = scalar_lea.vmem %s12, %s557
        $region68: #{tpu_custom_call.1} parent=15 // pred_fallthru
          _
        // Predicated region
        $region69: #{tpu_custom_call.1} parent=15 // pred_check
          %p559 = pneg %p399
        $region70: #{tpu_custom_call.1} parent=15 // pred_check_branch
          %561 = sbr.rel (%p559) target = $region72
        $region71: #{tpu_custom_call.1} parent=15 // pred_region
          %p562 = scmp.lt.s32.totalorder %s36, 1
          %s563 = scalar_select %p562, %s36, 1
          %s564 = scalar_lea.vmem %s13, %s563
        $region72: #{tpu_custom_call.1} parent=15 // pred_fallthru
          _
      $region16: #{tpu_custom_call.1} parent=5 // pred_fallthru
        _
      %p565 = scmp.le.s32.totalorder 1, %s29
      %p566 = scmp.lt.s32.totalorder %s29, 5
      %p567 = pnand %p565, %p566
      %p568 = pneg %p567
      // Predicated region
      $region73: #{tpu_custom_call.1} parent=5 // pred_check
        _
      $region74: #{tpu_custom_call.1} parent=5 // pred_check_branch
        %570 = sbr.rel (%p567) target = $region76
      $region75: #{tpu_custom_call.1} parent=5 // pred_region
        %s571 = ssub.s32 %s29, 1
        %s572 = sand.u32 %s54, 1
        %s573 = scalar_lea.sflag [#allocation4], %s572
        %s574 = sand.u32 %s54, 1
        %s575 = smul.addr %s574, 8
        %s576 = scalar_lea.vmem [#allocation3], %s575
        // Predicated region
        $region77: #{tpu_custom_call.1} parent=75 // pred_check
          %p577 = pneg %p67
        $region78: #{tpu_custom_call.1} parent=75 // pred_check_branch
          %579 = sbr.rel (%p577) target = $region80
        $region79: #{tpu_custom_call.1} parent=75 // pred_region
          %580 = dma.done %s573, 128
        $region80: #{tpu_custom_call.1} parent=75 // pred_fallthru
          _
        %s581 = sand.u32 %s80, 1
        %s582 = scalar_lea.sflag [#allocation7], %s581
        %s583 = sand.u32 %s80, 1
        %s584 = scalar_lea.vmem [#allocation6], %s583
        // Predicated region
        $region81: #{tpu_custom_call.1} parent=75 // pred_check
          %p585 = pneg %p93
        $region82: #{tpu_custom_call.1} parent=75 // pred_check_branch
          %587 = sbr.rel (%p585) target = $region84
        $region83: #{tpu_custom_call.1} parent=75 // pred_region
          %588 = dma.done %s582, 16
        $region84: #{tpu_custom_call.1} parent=75 // pred_fallthru
          _
        %s589 = sand.u32 %s54, 1
        %s590 = scalar_lea.sflag [#allocation4], %s589
        %s591 = sand.u32 %s54, 1
        %s592 = smul.addr %s591, 8
        %s593 = scalar_lea.vmem [#allocation3], %s592
        %p594 = pneg %p67
        %p595 = pneg %p64
        %s596 = sand.u32 %s80, 1
        %s597 = scalar_lea.sflag [#allocation7], %s596
        %s598 = sand.u32 %s80, 1
        %s599 = scalar_lea.vmem [#allocation6], %s598
        %p600 = pneg %p93
        %p601 = pneg %p90
        %p602 = scmp.lt.s32.totalorder %s38, 1
        %s603 = scalar_select %p602, %s38, 1
        %s604 = smul.addr %s603, 4
        %s605 = smul.addr %s604, 4
        %s606 = scalar_lea.vmem %s2, %s605
        %p607 = pneg %p119
        %p608 = pneg %p116
        %p609 = scmp.lt.s32.totalorder %s38, 1
        %s610 = scalar_select %p609, %s38, 1
        %s611 = scalar_lea.vmem %s3, %s610
        %p612 = pneg %p145
        %p613 = pneg %p142
        %p614 = scmp.lt.s32.totalorder %s38, 1
        %s615 = scalar_select %p614, %s38, 1
        %s616 = smul.addr %s615, 4
        %s617 = smul.addr %s616, 4
        %s618 = scalar_lea.vmem %s4, %s617
        %p619 = pneg %p171
        %p620 = pneg %p168
        %p621 = scmp.lt.s32.totalorder %s38, 1
        %s622 = scalar_select %p621, %s38, 1
        %s623 = scalar_lea.vmem %s5, %s622
        %p624 = pneg %p197
        %p625 = pneg %p194
        %p626 = scmp.lt.s32.totalorder %s38, 1
        %s627 = scalar_select %p626, %s38, 1
        %s628 = scalar_lea.vmem %s6, %s627
        %p629 = pneg %p223
        %p630 = pneg %p220
        %p631 = scmp.lt.s32.totalorder %s38, 1
        %s632 = scalar_select %p631, %s38, 1
        %s633 = scalar_lea.vmem %s7, %s632
        %p634 = pneg %p249
        %p635 = pneg %p246
        %p636 = scmp.lt.s32.totalorder %s38, 1
        %s637 = scalar_select %p636, %s38, 1
        %s638 = smul.addr %s637, 4
        %s639 = smul.addr %s638, 4
        %s640 = scalar_lea.vmem %s8, %s639
        %p641 = pneg %p275
        %p642 = pneg %p272
        %p643 = scmp.lt.s32.totalorder %s38, 1
        %s644 = scalar_select %p643, %s38, 1
        %s645 = scalar_lea.vmem %s9, %s644
        %p646 = pneg %p301
        %p647 = pneg %p298
        %p648 = scmp.lt.s32.totalorder %s38, 1
        %s649 = scalar_select %p648, %s38, 1
        %s650 = smul.addr %s649, 8
        %s651 = smul.addr %s650, 4
        %s652 = scalar_lea.vmem %s10, %s651
        %p653 = pneg %p327
        %p654 = pneg %p324
        %p655 = scmp.lt.s32.totalorder %s38, 1
        %s656 = scalar_select %p655, %s38, 1
        %s657 = scalar_lea.vmem %s11, %s656
        %p658 = pneg %p353
        %p659 = pneg %p350
        %p660 = scmp.lt.s32.totalorder %s38, 1
        %s661 = scalar_select %p660, %s38, 1
        %s662 = scalar_lea.vmem %s12, %s661
        %p663 = pneg %p379
        %p664 = pneg %p376
        %p665 = scmp.lt.s32.totalorder %s38, 1
        %s666 = scalar_select %p665, %s38, 1
        %s667 = scalar_lea.vmem %s13, %s666
        %p668 = pneg %p405
        %p669 = pneg %p402
        %p670 = pneg %p431
        %p671 = pneg %p428
        %s672 = sand.u32 %s418, 1
        %s673 = scalar_lea.sflag [#allocation5], %s672
        %s674 = sand.u32 %s418, 1
        %s675 = smul.addr %s674, 8
        %s676 = scalar_lea.vmem [#allocation8], %s675
        %p677 = scmp.lt.s32.totalorder %s38, 1
        %s678 = scalar_select %p677, %s38, 1
        %s679 = smul.addr %s678, 4
        %s680 = smul.addr %s679, 4
        %s681 = scalar_lea.vmem %s2, %s680
        %p682 = scmp.lt.s32.totalorder %s38, 1
        %s683 = scalar_select %p682, %s38, 1
        %s684 = scalar_lea.vmem %s3, %s683
        %p685 = scmp.lt.s32.totalorder %s38, 1
        %s686 = scalar_select %p685, %s38, 1
        %s687 = smul.addr %s686, 4
        %s688 = smul.addr %s687, 4
        %s689 = scalar_lea.vmem %s4, %s688
        %p690 = scmp.lt.s32.totalorder %s38, 1
        %s691 = scalar_select %p690, %s38, 1
        %s692 = scalar_lea.vmem %s5, %s691
        %p693 = scmp.lt.s32.totalorder %s38, 1
        %s694 = scalar_select %p693, %s38, 1
        %s695 = scalar_lea.vmem %s6, %s694
        %p696 = scmp.lt.s32.totalorder %s38, 1
        %s697 = scalar_select %p696, %s38, 1
        %s698 = scalar_lea.vmem %s7, %s697
        %p699 = scmp.lt.s32.totalorder %s38, 1
        %s700 = scalar_select %p699, %s38, 1
        %s701 = smul.addr %s700, 4
        %s702 = smul.addr %s701, 4
        %s703 = scalar_lea.vmem %s8, %s702
        %p704 = scmp.lt.s32.totalorder %s38, 1
        %s705 = scalar_select %p704, %s38, 1
        %s706 = scalar_lea.vmem %s9, %s705
        %p707 = scmp.lt.s32.totalorder %s38, 1
        %s708 = scalar_select %p707, %s38, 1
        %s709 = smul.addr %s708, 8
        %s710 = smul.addr %s709, 4
        %s711 = scalar_lea.vmem %s10, %s710
        %p712 = scmp.lt.s32.totalorder %s38, 1
        %s713 = scalar_select %p712, %s38, 1
        %s714 = scalar_lea.vmem %s11, %s713
        %p715 = scmp.lt.s32.totalorder %s38, 1
        %s716 = scalar_select %p715, %s38, 1
        %s717 = scalar_lea.vmem %s12, %s716
        %p718 = scmp.lt.s32.totalorder %s38, 1
        %s719 = scalar_select %p718, %s38, 1
        %s720 = scalar_lea.vmem %s13, %s719
        %p722 = scmp.eq.s32.totalorder %s38, 0
        // Predicated region
        $region85: #{tpu_custom_call.1} parent=75 // pred_check
          %p723 = pneg %p722
        $region86: #{tpu_custom_call.1} parent=75 // pred_check_branch
          %725 = sbr.rel (%p723) target = $region88
        $region87: #{tpu_custom_call.1} parent=75 // pred_region
          %v726 = vld [vmem:[%s576] sm:$0xff]
          %s727 = smul.u32 %s39, 8
          %s728 = scalar_lea.vmem [#allocation2], %s727
          %vm729 = vcmask 261120
          %730 = vst.msk [vmem:[%s728] sm:$0xff] %vm729, %v726
        $region88: #{tpu_custom_call.1} parent=75 // pred_fallthru
          _
        %s731 = smul.u32 %s39, 8
        %s732 = scalar_lea.vmem [#allocation2], %s731
        %v733 = vld [vmem:[%s732] sm:$0xff]
        %v734 = vld [vmem:[%s584] sm:$0x1]
        %v735 = vpack.c.bf16 %v733, %v733
        %v736 = vld [vmem:[%s681] sm:$0xf]
        %v737 = vld [vmem:[%s681 + $0x4] sm:$0xf]
        %v738 = vld [vmem:[%s681 + $0x8] sm:$0xf]
        %v739 = vld [vmem:[%s681 + $0xc] sm:$0xf]
        %v740 = vld [vmem:[%s684] sm:$0x1]
        %v742 = vlaneseq
        %v743 = vshrl.u32 %v742, 7
        %v744 = vsub.s32 0, %v743
        %v745 = vrot.slane %v740, %v744
        %v751 = vunpack.c.l.b16 %v736
        %v752 = vunpack.c.l.b16 %v737
        %v753 = vunpack.c.l.b16 %v738
        %v754 = vunpack.c.l.b16 %v739
        %v755 = vpack.c.b16 %v752, %v751
        %v756 = vpack.c.b16 %v754, %v753
        %vm759 = vcmask 261120
        %v761 = vsel %vm759, %v735, 0
        %763 = vmatprep.subr.bf16.mxu0 0
        %764 = vmatpush1.bf16.msra.mxu0 0
        %765 = vmatprep.subr.bf16.mxu0 0
        %766 = vmatpush1.bf16.msra.mxu0 0
        %767 = vmatprep.subr.bf16.mxu0 0
        %768 = vmatpush1.bf16.msra.mxu0 0
        %769 = vmatprep.subr.bf16.mxu0 0
        %770 = vmatpush1.bf16.msra.mxu0 0
        %771 = vmatprep.subr.bf16.mxu0 0
        %772 = vmatpush1.bf16.msra.mxu0 0
        %773 = vmatprep.subr.bf16.mxu0 0
        %774 = vmatpush1.bf16.msra.mxu0 0
        %775 = vmatprep.subr.bf16.mxu0 0
        %776 = vmatpush1.bf16.msra.mxu0 %v756
        %777 = vmatprep.subr.bf16.mxu0 0
        %778 = vmatpush1.bf16.msra.mxu0 %v755
        %779 = vmatprep.subr.bf16.mxu0 0
        %780 = vmatpush2.bf16.msra.mxu0 0
        %781 = vmatprep.subr.bf16.mxu0 0
        %782 = vmatpush2.bf16.msra.mxu0 0
        %783 = vmatprep.subr.bf16.mxu0 0
        %784 = vmatpush2.bf16.msra.mxu0 0
        %785 = vmatprep.subr.bf16.mxu0 0
        %786 = vmatpush2.bf16.msra.mxu0 0
        %787 = vmatprep.subr.bf16.mxu0 0
        %788 = vmatpush2.bf16.msra.mxu0 0
        %789 = vmatprep.subr.bf16.mxu0 0
        %790 = vmatpush2.bf16.msra.mxu0 0
        %791 = vmatprep.subr.bf16.mxu0 0
        %792 = vmatpush2.bf16.msra.mxu0 0
        %793 = vmatprep.subr.bf16.mxu0 0
        %794 = vmatpush2.bf16.msra.mxu0 0
        %795 = vmatprep.mubr.bf16.mxu0 0
        %796 = vmatmul.mubr.bf16.gmra.mxu0 %v761
        %v797 = vpop.f32.mrf.mxu0
        %v798 = vadd.f32 %v745, %v797
        %v799 = vpop.f32.mrf.mxu0
        %v800 = vpop.f32.mrf.mxu0
        %v801 = vpop.f32.mrf.mxu0
        %802 = vdwg.mxu0
        %v803 = vpack.c.bf16 %v798, %v798
        %805 = vrot.lane.b32.xlu0 %v803, 120
        %v806 = vpop.permute.xlu0 %805
        %807 = vrot.lane.b32.xlu0 %v803, 112
        %v808 = vpop.permute.xlu0 %807
        %809 = vrot.lane.b32.xlu0 %v803, 104
        %v810 = vpop.permute.xlu0 %809
        %v812 = vunpack.c.l.s4 1983009808
        %v813 = vunpack.c.0.s8 %v812
        %v814 = vlaneseq
        %v815 = vshrl.u32 %v814, 7
        %v816 = vsub.s32 %v813, %v815
        %v817 = vrot.slane %v803, %v816
        %v820 = vunpack.c.l.s4 1983009808
        %v821 = vunpack.c.0.s8 %v820
        %v822 = vlaneseq
        %v823 = vshrl.u32 %v822, 7
        %v824 = vsub.s32 %v821, %v823
        %v825 = vrot.slane %v808, %v824
        %v826 = vcombine.low %v817, %v825
        %v827 = vcombine.high %v817, %v825
        %v829 = vunpack.c.l.s4 1934713408
        %v830 = vunpack.c.0.s8 %v829
        %v831 = vlaneseq
        %v832 = vshrl.u32 %v831, 7
        %v833 = vsub.s32 %v830, %v832
        %v834 = vrot.slane %v826, %v833
        %v836 = vunpack.c.l.s4 1934713408
        %v837 = vunpack.c.0.s8 %v836
        %v838 = vlaneseq
        %v839 = vshrl.u32 %v838, 7
        %v840 = vsub.s32 %v837, %v839
        %v841 = vrot.slane %v827, %v840
        %v842 = vcombine.high %v834, 0
        %v843 = vcombine.high %v841, 0
        %v846 = vunpack.c.l.s4 1983009808
        %v847 = vunpack.c.0.s8 %v846
        %v848 = vlaneseq
        %v849 = vshrl.u32 %v848, 7
        %v850 = vsub.s32 %v847, %v849
        %v851 = vrot.slane %v806, %v850
        %v854 = vunpack.c.l.s4 1983009808
        %v855 = vunpack.c.0.s8 %v854
        %v856 = vlaneseq
        %v857 = vshrl.u32 %v856, 7
        %v858 = vsub.s32 %v855, %v857
        %v859 = vrot.slane %v810, %v858
        %v860 = vcombine.low %v851, %v859
        %v861 = vcombine.high %v851, %v859
        %v863 = vunpack.c.l.s4 1934713408
        %v864 = vunpack.c.0.s8 %v863
        %v865 = vlaneseq
        %v866 = vshrl.u32 %v865, 7
        %v867 = vsub.s32 %v864, %v866
        %v868 = vrot.slane %v860, %v867
        %v870 = vunpack.c.l.s4 1934713408
        %v871 = vunpack.c.0.s8 %v870
        %v872 = vlaneseq
        %v873 = vshrl.u32 %v872, 7
        %v874 = vsub.s32 %v871, %v873
        %v875 = vrot.slane %v861, %v874
        %v876 = vcombine.high %v868, 0
        %v877 = vcombine.high %v875, 0
        %v880 = vpack.i.b16 %v868, %v834
        %v882 = vshrl.u32 %v834, 16
        %v883 = vshrl.u32 %v868, 16
        %v884 = vpack.i.b16 %v883, %v882
        %v888 = vpack.i.b16 %v876, %v842
        %v890 = vshrl.u32 %v842, 16
        %v891 = vshrl.u32 %v876, 16
        %v892 = vpack.i.b16 %v891, %v890
        %v896 = vpack.i.b16 %v875, %v841
        %v898 = vshrl.u32 %v841, 16
        %v899 = vshrl.u32 %v875, 16
        %v900 = vpack.i.b16 %v899, %v898
        %v904 = vpack.i.b16 %v877, %v843
        %v906 = vshrl.u32 %v843, 16
        %v907 = vshrl.u32 %v877, 16
        %v908 = vpack.i.b16 %v907, %v906
        %v910 = vcombine.low %v880, %v896
        %v912 = vunpack.c.l.s4 1983009808
        %v913 = vunpack.c.0.s8 %v912
        %v914 = vlaneseq
        %v915 = vshrl.u32 %v914, 7
        %v916 = vsub.s32 %v913, %v915
        %v917 = vrot.slane %v910, %v916
        %v918 = vcombine.low %v888, %v904
        %v920 = vunpack.c.l.s4 1983009808
        %v921 = vunpack.c.0.s8 %v920
        %v922 = vlaneseq
        %v923 = vshrl.u32 %v922, 7
        %v924 = vsub.s32 %v921, %v923
        %v925 = vrot.slane %v918, %v924
        %v926 = vcombine.low %v917, %v925
        %v928 = vunpack.c.l.s4 1934713408
        %v929 = vunpack.c.0.s8 %v928
        %v930 = vlaneseq
        %v931 = vshrl.u32 %v930, 7
        %v932 = vsub.s32 %v929, %v931
        %v933 = vrot.slane %v926, %v932
        %v934 = vcombine.high %v933, 0
        %v935 = vcombine.low %v884, %v900
        %v937 = vunpack.c.l.s4 1983009808
        %v938 = vunpack.c.0.s8 %v937
        %v939 = vlaneseq
        %v940 = vshrl.u32 %v939, 7
        %v941 = vsub.s32 %v938, %v940
        %v942 = vrot.slane %v935, %v941
        %v943 = vcombine.low %v892, %v908
        %v945 = vunpack.c.l.s4 1983009808
        %v946 = vunpack.c.0.s8 %v945
        %v947 = vlaneseq
        %v948 = vshrl.u32 %v947, 7
        %v949 = vsub.s32 %v946, %v948
        %v950 = vrot.slane %v943, %v949
        %v951 = vcombine.low %v942, %v950
        %v953 = vunpack.c.l.s4 1934713408
        %v954 = vunpack.c.0.s8 %v953
        %v955 = vlaneseq
        %v956 = vshrl.u32 %v955, 7
        %v957 = vsub.s32 %v954, %v956
        %v958 = vrot.slane %v951, %v957
        %v959 = vcombine.high %v958, 0
        %v962 = vpack.i.b16 %v958, %v933
        %v963 = vshrl.u32 %v933, 16
        %v964 = vshrl.u32 %v958, 16
        %v965 = vpack.i.b16 %v964, %v963
        %v968 = vpack.i.b16 %v959, %v934
        %v969 = vshrl.u32 %v934, 16
        %v970 = vshrl.u32 %v959, 16
        %v971 = vpack.i.b16 %v970, %v969
        %972 = vrot.lane.b32.xlu0 %v803, 96
        %v973 = vpop.permute.xlu0 %972
        %974 = vrot.lane.b32.xlu0 %v806, 96
        %v975 = vpop.permute.xlu0 %974
        %976 = vrot.lane.b32.xlu0 %v808, 96
        %v977 = vpop.permute.xlu0 %976
        %978 = vrot.lane.b32.xlu0 %v810, 96
        %v979 = vpop.permute.xlu0 %978
        %v982 = vunpack.c.l.s4 1983009808
        %v983 = vunpack.c.0.s8 %v982
        %v984 = vlaneseq
        %v985 = vshrl.u32 %v984, 7
        %v986 = vsub.s32 %v983, %v985
        %v987 = vrot.slane %v973, %v986
        %v990 = vunpack.c.l.s4 1983009808
        %v991 = vunpack.c.0.s8 %v990
        %v992 = vlaneseq
        %v993 = vshrl.u32 %v992, 7
        %v994 = vsub.s32 %v991, %v993
        %v995 = vrot.slane %v977, %v994
        %v996 = vcombine.low %v987, %v995
        %v997 = vcombine.high %v987, %v995
        %v999 = vunpack.c.l.s4 1934713408
        %v1000 = vunpack.c.0.s8 %v999
        %v1001 = vlaneseq
        %v1002 = vshrl.u32 %v1001, 7
        %v1003 = vsub.s32 %v1000, %v1002
        %v1004 = vrot.slane %v996, %v1003
        %v1006 = vunpack.c.l.s4 1934713408
        %v1007 = vunpack.c.0.s8 %v1006
        %v1008 = vlaneseq
        %v1009 = vshrl.u32 %v1008, 7
        %v1010 = vsub.s32 %v1007, %v1009
        %v1011 = vrot.slane %v997, %v1010
        %v1012 = vcombine.high %v1004, 0
        %v1013 = vcombine.high %v1011, 0
        %v1016 = vunpack.c.l.s4 1983009808
        %v1017 = vunpack.c.0.s8 %v1016
        %v1018 = vlaneseq
        %v1019 = vshrl.u32 %v1018, 7
        %v1020 = vsub.s32 %v1017, %v1019
        %v1021 = vrot.slane %v975, %v1020
        %v1024 = vunpack.c.l.s4 1983009808
        %v1025 = vunpack.c.0.s8 %v1024
        %v1026 = vlaneseq
        %v1027 = vshrl.u32 %v1026, 7
        %v1028 = vsub.s32 %v1025, %v1027
        %v1029 = vrot.slane %v979, %v1028
        %v1030 = vcombine.low %v1021, %v1029
        %v1031 = vcombine.high %v1021, %v1029
        %v1033 = vunpack.c.l.s4 1934713408
        %v1034 = vunpack.c.0.s8 %v1033
        %v1035 = vlaneseq
        %v1036 = vshrl.u32 %v1035, 7
        %v1037 = vsub.s32 %v1034, %v1036
        %v1038 = vrot.slane %v1030, %v1037
        %v1040 = vunpack.c.l.s4 1934713408
        %v1041 = vunpack.c.0.s8 %v1040
        %v1042 = vlaneseq
        %v1043 = vshrl.u32 %v1042, 7
        %v1044 = vsub.s32 %v1041, %v1043
        %v1045 = vrot.slane %v1031, %v1044
        %v1046 = vcombine.high %v1038, 0
        %v1047 = vcombine.high %v1045, 0
        %v1050 = vpack.i.b16 %v1038, %v1004
        %v1052 = vshrl.u32 %v1004, 16
        %v1053 = vshrl.u32 %v1038, 16
        %v1054 = vpack.i.b16 %v1053, %v1052
        %v1058 = vpack.i.b16 %v1046, %v1012
        %v1060 = vshrl.u32 %v1012, 16
        %v1061 = vshrl.u32 %v1046, 16
        %v1062 = vpack.i.b16 %v1061, %v1060
        %v1066 = vpack.i.b16 %v1045, %v1011
        %v1068 = vshrl.u32 %v1011, 16
        %v1069 = vshrl.u32 %v1045, 16
        %v1070 = vpack.i.b16 %v1069, %v1068
        %v1074 = vpack.i.b16 %v1047, %v1013
        %v1076 = vshrl.u32 %v1013, 16
        %v1077 = vshrl.u32 %v1047, 16
        %v1078 = vpack.i.b16 %v1077, %v1076
        %v1080 = vcombine.low %v1050, %v1066
        %v1082 = vunpack.c.l.s4 1983009808
        %v1083 = vunpack.c.0.s8 %v1082
        %v1084 = vlaneseq
        %v1085 = vshrl.u32 %v1084, 7
        %v1086 = vsub.s32 %v1083, %v1085
        %v1087 = vrot.slane %v1080, %v1086
        %v1088 = vcombine.low %v1058, %v1074
        %v1090 = vunpack.c.l.s4 1983009808
        %v1091 = vunpack.c.0.s8 %v1090
        %v1092 = vlaneseq
        %v1093 = vshrl.u32 %v1092, 7
        %v1094 = vsub.s32 %v1091, %v1093
        %v1095 = vrot.slane %v1088, %v1094
        %v1096 = vcombine.low %v1087, %v1095
        %v1098 = vunpack.c.l.s4 1934713408
        %v1099 = vunpack.c.0.s8 %v1098
        %v1100 = vlaneseq
        %v1101 = vshrl.u32 %v1100, 7
        %v1102 = vsub.s32 %v1099, %v1101
        %v1103 = vrot.slane %v1096, %v1102
        %v1104 = vcombine.high %v1103, 0
        %v1105 = vcombine.low %v1054, %v1070
        %v1107 = vunpack.c.l.s4 1983009808
        %v1108 = vunpack.c.0.s8 %v1107
        %v1109 = vlaneseq
        %v1110 = vshrl.u32 %v1109, 7
        %v1111 = vsub.s32 %v1108, %v1110
        %v1112 = vrot.slane %v1105, %v1111
        %v1113 = vcombine.low %v1062, %v1078
        %v1115 = vunpack.c.l.s4 1983009808
        %v1116 = vunpack.c.0.s8 %v1115
        %v1117 = vlaneseq
        %v1118 = vshrl.u32 %v1117, 7
        %v1119 = vsub.s32 %v1116, %v1118
        %v1120 = vrot.slane %v1113, %v1119
        %v1121 = vcombine.low %v1112, %v1120
        %v1123 = vunpack.c.l.s4 1934713408
        %v1124 = vunpack.c.0.s8 %v1123
        %v1125 = vlaneseq
        %v1126 = vshrl.u32 %v1125, 7
        %v1127 = vsub.s32 %v1124, %v1126
        %v1128 = vrot.slane %v1121, %v1127
        %v1129 = vcombine.high %v1128, 0
        %v1132 = vpack.i.b16 %v1128, %v1103
        %v1133 = vshrl.u32 %v1103, 16
        %v1134 = vshrl.u32 %v1128, 16
        %v1135 = vpack.i.b16 %v1134, %v1133
        %v1138 = vpack.i.b16 %v1129, %v1104
        %v1139 = vshrl.u32 %v1104, 16
        %v1140 = vshrl.u32 %v1129, 16
        %v1141 = vpack.i.b16 %v1140, %v1139
        %1142 = vrot.lane.b32.xlu0 %v803, 64
        %v1143 = vpop.permute.xlu0 %1142
        %1144 = vrot.lane.b32.xlu0 %v806, 64
        %v1145 = vpop.permute.xlu0 %1144
        %1146 = vrot.lane.b32.xlu0 %v808, 64
        %v1147 = vpop.permute.xlu0 %1146
        %1148 = vrot.lane.b32.xlu0 %v810, 64
        %v1149 = vpop.permute.xlu0 %1148
        %v1152 = vunpack.c.l.s4 1983009808
        %v1153 = vunpack.c.0.s8 %v1152
        %v1154 = vlaneseq
        %v1155 = vshrl.u32 %v1154, 7
        %v1156 = vsub.s32 %v1153, %v1155
        %v1157 = vrot.slane %v1143, %v1156
        %v1160 = vunpack.c.l.s4 1983009808
        %v1161 = vunpack.c.0.s8 %v1160
        %v1162 = vlaneseq
        %v1163 = vshrl.u32 %v1162, 7
        %v1164 = vsub.s32 %v1161, %v1163
        %v1165 = vrot.slane %v1147, %v1164
        %v1166 = vcombine.low %v1157, %v1165
        %v1167 = vcombine.high %v1157, %v1165
        %v1169 = vunpack.c.l.s4 1934713408
        %v1170 = vunpack.c.0.s8 %v1169
        %v1171 = vlaneseq
        %v1172 = vshrl.u32 %v1171, 7
        %v1173 = vsub.s32 %v1170, %v1172
        %v1174 = vrot.slane %v1166, %v1173
        %v1176 = vunpack.c.l.s4 1934713408
        %v1177 = vunpack.c.0.s8 %v1176
        %v1178 = vlaneseq
        %v1179 = vshrl.u32 %v1178, 7
        %v1180 = vsub.s32 %v1177, %v1179
        %v1181 = vrot.slane %v1167, %v1180
        %v1182 = vcombine.high %v1174, 0
        %v1183 = vcombine.high %v1181, 0
        %v1186 = vunpack.c.l.s4 1983009808
        %v1187 = vunpack.c.0.s8 %v1186
        %v1188 = vlaneseq
        %v1189 = vshrl.u32 %v1188, 7
        %v1190 = vsub.s32 %v1187, %v1189
        %v1191 = vrot.slane %v1145, %v1190
        %v1194 = vunpack.c.l.s4 1983009808
        %v1195 = vunpack.c.0.s8 %v1194
        %v1196 = vlaneseq
        %v1197 = vshrl.u32 %v1196, 7
        %v1198 = vsub.s32 %v1195, %v1197
        %v1199 = vrot.slane %v1149, %v1198
        %v1200 = vcombine.low %v1191, %v1199
        %v1201 = vcombine.high %v1191, %v1199
        %v1203 = vunpack.c.l.s4 1934713408
        %v1204 = vunpack.c.0.s8 %v1203
        %v1205 = vlaneseq
        %v1206 = vshrl.u32 %v1205, 7
        %v1207 = vsub.s32 %v1204, %v1206
        %v1208 = vrot.slane %v1200, %v1207
        %v1210 = vunpack.c.l.s4 1934713408
        %v1211 = vunpack.c.0.s8 %v1210
        %v1212 = vlaneseq
        %v1213 = vshrl.u32 %v1212, 7
        %v1214 = vsub.s32 %v1211, %v1213
        %v1215 = vrot.slane %v1201, %v1214
        %v1216 = vcombine.high %v1208, 0
        %v1217 = vcombine.high %v1215, 0
        %v1220 = vpack.i.b16 %v1208, %v1174
        %v1222 = vshrl.u32 %v1174, 16
        %v1223 = vshrl.u32 %v1208, 16
        %v1224 = vpack.i.b16 %v1223, %v1222
        %v1228 = vpack.i.b16 %v1216, %v1182
        %v1230 = vshrl.u32 %v1182, 16
        %v1231 = vshrl.u32 %v1216, 16
        %v1232 = vpack.i.b16 %v1231, %v1230
        %v1236 = vpack.i.b16 %v1215, %v1181
        %v1238 = vshrl.u32 %v1181, 16
        %v1239 = vshrl.u32 %v1215, 16
        %v1240 = vpack.i.b16 %v1239, %v1238
        %v1244 = vpack.i.b16 %v1217, %v1183
        %v1246 = vshrl.u32 %v1183, 16
        %v1247 = vshrl.u32 %v1217, 16
        %v1248 = vpack.i.b16 %v1247, %v1246
        %v1250 = vcombine.low %v1220, %v1236
        %v1252 = vunpack.c.l.s4 1983009808
        %v1253 = vunpack.c.0.s8 %v1252
        %v1254 = vlaneseq
        %v1255 = vshrl.u32 %v1254, 7
        %v1256 = vsub.s32 %v1253, %v1255
        %v1257 = vrot.slane %v1250, %v1256
        %v1258 = vcombine.low %v1228, %v1244
        %v1260 = vunpack.c.l.s4 1983009808
        %v1261 = vunpack.c.0.s8 %v1260
        %v1262 = vlaneseq
        %v1263 = vshrl.u32 %v1262, 7
        %v1264 = vsub.s32 %v1261, %v1263
        %v1265 = vrot.slane %v1258, %v1264
        %v1266 = vcombine.low %v1257, %v1265
        %v1268 = vunpack.c.l.s4 1934713408
        %v1269 = vunpack.c.0.s8 %v1268
        %v1270 = vlaneseq
        %v1271 = vshrl.u32 %v1270, 7
        %v1272 = vsub.s32 %v1269, %v1271
        %v1273 = vrot.slane %v1266, %v1272
        %v1274 = vcombine.high %v1273, 0
        %v1275 = vcombine.low %v1224, %v1240
        %v1277 = vunpack.c.l.s4 1983009808
        %v1278 = vunpack.c.0.s8 %v1277
        %v1279 = vlaneseq
        %v1280 = vshrl.u32 %v1279, 7
        %v1281 = vsub.s32 %v1278, %v1280
        %v1282 = vrot.slane %v1275, %v1281
        %v1283 = vcombine.low %v1232, %v1248
        %v1285 = vunpack.c.l.s4 1983009808
        %v1286 = vunpack.c.0.s8 %v1285
        %v1287 = vlaneseq
        %v1288 = vshrl.u32 %v1287, 7
        %v1289 = vsub.s32 %v1286, %v1288
        %v1290 = vrot.slane %v1283, %v1289
        %v1291 = vcombine.low %v1282, %v1290
        %v1293 = vunpack.c.l.s4 1934713408
        %v1294 = vunpack.c.0.s8 %v1293
        %v1295 = vlaneseq
        %v1296 = vshrl.u32 %v1295, 7
        %v1297 = vsub.s32 %v1294, %v1296
        %v1298 = vrot.slane %v1291, %v1297
        %v1299 = vcombine.high %v1298, 0
        %v1302 = vpack.i.b16 %v1298, %v1273
        %v1303 = vshrl.u32 %v1273, 16
        %v1304 = vshrl.u32 %v1298, 16
        %v1305 = vpack.i.b16 %v1304, %v1303
        %v1308 = vpack.i.b16 %v1299, %v1274
        %v1309 = vshrl.u32 %v1274, 16
        %v1310 = vshrl.u32 %v1299, 16
        %v1311 = vpack.i.b16 %v1310, %v1309
        %v1313 = vlaneseq
        %v1314 = vshrl.u32 %v1313, 7
        %v1315 = vsub.s32 0, %v1314
        %v1316 = vrot.slane %v734, %v1315
        %vm1318 = vcmask 64512
        %v1320 = vsel %vm1318, %v962, 0
        %v1323 = vsel %vm1318, %v1132, 0
        %1325 = vmatprep.subr.bf16.mxu0 0
        %1326 = vmatpush1.bf16.xpose.msra.mxu0 0
        %1327 = vmatprep.subr.bf16.mxu0 0
        %1328 = vmatpush1.bf16.xpose.msra.mxu0 0
        %1329 = vmatprep.subr.bf16.mxu0 0
        %1330 = vmatpush1.bf16.xpose.msra.mxu0 0
        %1331 = vmatprep.subr.bf16.mxu0 0
        %1332 = vmatpush1.bf16.xpose.msra.mxu0 0
        %1333 = vmatprep.subr.bf16.mxu0 0
        %1334 = vmatpush1.bf16.xpose.msra.mxu0 0
        %1335 = vmatprep.subr.bf16.mxu0 0
        %1336 = vmatpush1.bf16.xpose.msra.mxu0 0
        %1337 = vmatprep.subr.bf16.mxu0 0
        %1338 = vmatpush1.bf16.xpose.msra.mxu0 0
        %1339 = vmatprep.subr.bf16.mxu0 0
        %1340 = vmatpush1.bf16.xpose.msra.mxu0 %v1323
        %1341 = vmatprep.subr.bf16.mxu0 0
        %1342 = vmatpush2.bf16.xpose.msra.mxu0 0
        %1343 = vmatprep.subr.bf16.mxu0 0
        %1344 = vmatpush2.bf16.xpose.msra.mxu0 0
        %1345 = vmatprep.subr.bf16.mxu0 0
        %1346 = vmatpush2.bf16.xpose.msra.mxu0 0
        %1347 = vmatprep.subr.bf16.mxu0 0
        %1348 = vmatpush2.bf16.xpose.msra.mxu0 0
        %1349 = vmatprep.subr.bf16.mxu0 0
        %1350 = vmatpush2.bf16.xpose.msra.mxu0 0
        %1351 = vmatprep.subr.bf16.mxu0 0
        %1352 = vmatpush2.bf16.xpose.msra.mxu0 0
        %1353 = vmatprep.subr.bf16.mxu0 0
        %1354 = vmatpush2.bf16.xpose.msra.mxu0 0
        %1355 = vmatprep.subr.bf16.mxu0 0
        %1356 = vmatpush2.bf16.xpose.msra.mxu0 0
        %1357 = vmatprep.mubr.bf16.mxu0 0
        %1358 = vmatmul.mubr.bf16.gmra.mxu0 %v1320
        %v1359 = vpop.f32.mrf.mxu0
        %v1360 = vadd.f32 %v1316, %v1359
        %v1361 = vpop.f32.mrf.mxu0
        %v1362 = vpop.f32.mrf.mxu0
        %v1363 = vpop.f32.mrf.mxu0
        %1364 = vdwg.mxu0
        %v1366 = vsel %vm1318, %v965, 0
        %v1369 = vsel %vm1318, %v1135, 0
        %1371 = vmatprep.subr.bf16.mxu0 0
        %1372 = vmatpush1.bf16.xpose.msra.mxu0 0
        %1373 = vmatprep.subr.bf16.mxu0 0
        %1374 = vmatpush1.bf16.xpose.msra.mxu0 0
        %1375 = vmatprep.subr.bf16.mxu0 0
        %1376 = vmatpush1.bf16.xpose.msra.mxu0 0
        %1377 = vmatprep.subr.bf16.mxu0 0
        %1378 = vmatpush1.bf16.xpose.msra.mxu0 0
        %1379 = vmatprep.subr.bf16.mxu0 0
        %1380 = vmatpush1.bf16.xpose.msra.mxu0 0
        %1381 = vmatprep.subr.bf16.mxu0 0
        %1382 = vmatpush1.bf16.xpose.msra.mxu0 0
        %1383 = vmatprep.subr.bf16.mxu0 0
        %1384 = vmatpush1.bf16.xpose.msra.mxu0 0
        %1385 = vmatprep.subr.bf16.mxu0 0
        %1386 = vmatpush1.bf16.xpose.msra.mxu0 %v1369
        %1387 = vmatprep.subr.bf16.mxu0 0
        %1388 = vmatpush2.bf16.xpose.msra.mxu0 0
        %1389 = vmatprep.subr.bf16.mxu0 0
        %1390 = vmatpush2.bf16.xpose.msra.mxu0 0
        %1391 = vmatprep.subr.bf16.mxu0 0
        %1392 = vmatpush2.bf16.xpose.msra.mxu0 0
        %1393 = vmatprep.subr.bf16.mxu0 0
        %1394 = vmatpush2.bf16.xpose.msra.mxu0 0
        %1395 = vmatprep.subr.bf16.mxu0 0
        %1396 = vmatpush2.bf16.xpose.msra.mxu0 0
        %1397 = vmatprep.subr.bf16.mxu0 0
        %1398 = vmatpush2.bf16.xpose.msra.mxu0 0
        %1399 = vmatprep.subr.bf16.mxu0 0
        %1400 = vmatpush2.bf16.xpose.msra.mxu0 0
        %1401 = vmatprep.subr.bf16.mxu0 0
        %1402 = vmatpush2.bf16.xpose.msra.mxu0 0
        %1403 = vmatprep.mubr.bf16.mxu0 0
        %1404 = vmatmul.mubr.bf16.gmra.mxu0 %v1366
        %v1405 = vpop.f32.mrf.mxu0
        %v1406 = vadd.f32 %v1316, %v1405
        %v1407 = vpop.f32.mrf.mxu0
        %v1408 = vpop.f32.mrf.mxu0
        %v1409 = vpop.f32.mrf.mxu0
        %1410 = vdwg.mxu0
        %v1412 = vsel %vm1318, %v968, 0
        %v1415 = vsel %vm1318, %v1138, 0
        %1417 = vmatprep.subr.bf16.mxu0 0
        %1418 = vmatpush1.bf16.xpose.msra.mxu0 0
        %1419 = vmatprep.subr.bf16.mxu0 0
        %1420 = vmatpush1.bf16.xpose.msra.mxu0 0
        %1421 = vmatprep.subr.bf16.mxu0 0
        %1422 = vmatpush1.bf16.xpose.msra.mxu0 0
        %1423 = vmatprep.subr.bf16.mxu0 0
        %1424 = vmatpush1.bf16.xpose.msra.mxu0 0
        %1425 = vmatprep.subr.bf16.mxu0 0
        %1426 = vmatpush1.bf16.xpose.msra.mxu0 0
        %1427 = vmatprep.subr.bf16.mxu0 0
        %1428 = vmatpush1.bf16.xpose.msra.mxu0 0
        %1429 = vmatprep.subr.bf16.mxu0 0
        %1430 = vmatpush1.bf16.xpose.msra.mxu0 0
        %1431 = vmatprep.subr.bf16.mxu0 0
        %1432 = vmatpush1.bf16.xpose.msra.mxu0 %v1415
        %1433 = vmatprep.subr.bf16.mxu0 0
        %1434 = vmatpush2.bf16.xpose.msra.mxu0 0
        %1435 = vmatprep.subr.bf16.mxu0 0
        %1436 = vmatpush2.bf16.xpose.msra.mxu0 0
        %1437 = vmatprep.subr.bf16.mxu0 0
        %1438 = vmatpush2.bf16.xpose.msra.mxu0 0
        %1439 = vmatprep.subr.bf16.mxu0 0
        %1440 = vmatpush2.bf16.xpose.msra.mxu0 0
        %1441 = vmatprep.subr.bf16.mxu0 0
        %1442 = vmatpush2.bf16.xpose.msra.mxu0 0
        %1443 = vmatprep.subr.bf16.mxu0 0
        %1444 = vmatpush2.bf16.xpose.msra.mxu0 0
        %1445 = vmatprep.subr.bf16.mxu0 0
        %1446 = vmatpush2.bf16.xpose.msra.mxu0 0
        %1447 = vmatprep.subr.bf16.mxu0 0
        %1448 = vmatpush2.bf16.xpose.msra.mxu0 0
        %1449 = vmatprep.mubr.bf16.mxu0 0
        %1450 = vmatmul.mubr.bf16.gmra.mxu0 %v1412
        %v1451 = vpop.f32.mrf.mxu0
        %v1452 = vadd.f32 %v1316, %v1451
        %v1453 = vpop.f32.mrf.mxu0
        %v1454 = vpop.f32.mrf.mxu0
        %v1455 = vpop.f32.mrf.mxu0
        %1456 = vdwg.mxu0
        %v1458 = vsel %vm1318, %v971, 0
        %v1461 = vsel %vm1318, %v1141, 0
        %1463 = vmatprep.subr.bf16.mxu0 0
        %1464 = vmatpush1.bf16.xpose.msra.mxu0 0
        %1465 = vmatprep.subr.bf16.mxu0 0
        %1466 = vmatpush1.bf16.xpose.msra.mxu0 0
        %1467 = vmatprep.subr.bf16.mxu0 0
        %1468 = vmatpush1.bf16.xpose.msra.mxu0 0
        %1469 = vmatprep.subr.bf16.mxu0 0
        %1470 = vmatpush1.bf16.xpose.msra.mxu0 0
        %1471 = vmatprep.subr.bf16.mxu0 0
        %1472 = vmatpush1.bf16.xpose.msra.mxu0 0
        %1473 = vmatprep.subr.bf16.mxu0 0
        %1474 = vmatpush1.bf16.xpose.msra.mxu0 0
        %1475 = vmatprep.subr.bf16.mxu0 0
        %1476 = vmatpush1.bf16.xpose.msra.mxu0 0
        %1477 = vmatprep.subr.bf16.mxu0 0
        %1478 = vmatpush1.bf16.xpose.msra.mxu0 %v1461
        %1479 = vmatprep.subr.bf16.mxu0 0
        %1480 = vmatpush2.bf16.xpose.msra.mxu0 0
        %1481 = vmatprep.subr.bf16.mxu0 0
        %1482 = vmatpush2.bf16.xpose.msra.mxu0 0
        %1483 = vmatprep.subr.bf16.mxu0 0
        %1484 = vmatpush2.bf16.xpose.msra.mxu0 0
        %1485 = vmatprep.subr.bf16.mxu0 0
        %1486 = vmatpush2.bf16.xpose.msra.mxu0 0
        %1487 = vmatprep.subr.bf16.mxu0 0
        %1488 = vmatpush2.bf16.xpose.msra.mxu0 0
        %1489 = vmatprep.subr.bf16.mxu0 0
        %1490 = vmatpush2.bf16.xpose.msra.mxu0 0
        %1491 = vmatprep.subr.bf16.mxu0 0
        %1492 = vmatpush2.bf16.xpose.msra.mxu0 0
        %1493 = vmatprep.subr.bf16.mxu0 0
        %1494 = vmatpush2.bf16.xpose.msra.mxu0 0
        %1495 = vmatprep.mubr.bf16.mxu0 0
        %1496 = vmatmul.mubr.bf16.gmra.mxu0 %v1458
        %v1497 = vpop.f32.mrf.mxu0
        %v1498 = vadd.f32 %v1316, %v1497
        %v1499 = vpop.f32.mrf.mxu0
        %v1500 = vpop.f32.mrf.mxu0
        %v1501 = vpop.f32.mrf.mxu0
        %1502 = vdwg.mxu0
        %v1503 = vsel %vm1318, %v1360, -inf
        %1504 = vmax.xlane.f32.xlu0 %v1503
        %v1505 = vpop.xlane.xlu0 %1504
        %v1506 = vsel %vm1318, %v1406, -inf
        %1507 = vmax.xlane.f32.xlu0 %v1506
        %v1508 = vpop.xlane.xlu0 %1507
        %v1509 = vsel %vm1318, %v1452, -inf
        %1510 = vmax.xlane.f32.xlu0 %v1509
        %v1511 = vpop.xlane.xlu0 %1510
        %v1512 = vsel %vm1318, %v1498, -inf
        %1513 = vmax.xlane.f32.xlu0 %v1512
        %v1514 = vpop.xlane.xlu0 %1513
        %v1515 = vsub.f32 %v1360, %v1505
        %v1516 = vsub.f32 %v1406, %v1508
        %v1517 = vsub.f32 %v1452, %v1511
        %v1518 = vsub.f32 %v1498, %v1514
        %v1519 = vmul.f32 %v1515, 1.442695
        %v1520 = vpow.pop %v1519
        %v1521 = vmul.f32 %v1516, 1.442695
        %v1522 = vpow.pop %v1521
        %v1523 = vmul.f32 %v1517, 1.442695
        %v1524 = vpow.pop %v1523
        %v1525 = vmul.f32 %v1518, 1.442695
        %v1526 = vpow.pop %v1525
        %v1527 = vsel %vm1318, %v1520, 0.0
        %1528 = vadd.xlane.f32.xlu0 %v1527
        %v1529 = vpop.xlane.xlu0 %1528
        %v1530 = vsel %vm1318, %v1522, 0.0
        %1531 = vadd.xlane.f32.xlu0 %v1530
        %v1532 = vpop.xlane.xlu0 %1531
        %v1533 = vsel %vm1318, %v1524, 0.0
        %1534 = vadd.xlane.f32.xlu0 %v1533
        %v1535 = vpop.xlane.xlu0 %1534
        %v1536 = vsel %vm1318, %v1526, 0.0
        %1537 = vadd.xlane.f32.xlu0 %v1536
        %v1538 = vpop.xlane.xlu0 %1537
        %v1539 = vrcp.pop %v1529
        %v1540 = vrcp.pop %v1532
        %v1541 = vrcp.pop %v1535
        %v1542 = vrcp.pop %v1538
        %v1543 = vmul.f32 %v1520, %v1539
        %v1544 = vmul.f32 %v1522, %v1540
        %v1545 = vmul.f32 %v1524, %v1541
        %v1546 = vmul.f32 %v1526, %v1542
        %v1547 = vpack.c.bf16 %v1543, %v1543
        %v1548 = vpack.c.bf16 %v1544, %v1544
        %v1549 = vpack.c.bf16 %v1545, %v1545
        %v1550 = vpack.c.bf16 %v1546, %v1546
        %v1552 = vsel %vm1318, %v1547, 0
        %vm1554 = vcmask 1043456
        %v1556 = vsel %vm1554, %v1302, 0
        %1558 = vmatprep.subr.bf16.mxu0 0
        %1559 = vmatpush1.bf16.msra.mxu0 0
        %1560 = vmatprep.subr.bf16.mxu0 0
        %1561 = vmatpush1.bf16.msra.mxu0 0
        %1562 = vmatprep.subr.bf16.mxu0 0
        %1563 = vmatpush1.bf16.msra.mxu0 0
        %1564 = vmatprep.subr.bf16.mxu0 0
        %1565 = vmatpush1.bf16.msra.mxu0 0
        %1566 = vmatprep.subr.bf16.mxu0 0
        %1567 = vmatpush1.bf16.msra.mxu0 0
        %1568 = vmatprep.subr.bf16.mxu0 0
        %1569 = vmatpush1.bf16.msra.mxu0 0
        %1570 = vmatprep.subr.bf16.mxu0 0
        %1571 = vmatpush1.bf16.msra.mxu0 0
        %1572 = vmatprep.subr.bf16.mxu0 0
        %1573 = vmatpush1.bf16.msra.mxu0 %v1556
        %1574 = vmatprep.subr.bf16.mxu0 0
        %1575 = vmatpush2.bf16.msra.mxu0 0
        %1576 = vmatprep.subr.bf16.mxu0 0
        %1577 = vmatpush2.bf16.msra.mxu0 0
        %1578 = vmatprep.subr.bf16.mxu0 0
        %1579 = vmatpush2.bf16.msra.mxu0 0
        %1580 = vmatprep.subr.bf16.mxu0 0
        %1581 = vmatpush2.bf16.msra.mxu0 0
        %1582 = vmatprep.subr.bf16.mxu0 0
        %1583 = vmatpush2.bf16.msra.mxu0 0
        %1584 = vmatprep.subr.bf16.mxu0 0
        %1585 = vmatpush2.bf16.msra.mxu0 0
        %1586 = vmatprep.subr.bf16.mxu0 0
        %1587 = vmatpush2.bf16.msra.mxu0 0
        %1588 = vmatprep.subr.bf16.mxu0 0
        %1589 = vmatpush2.bf16.msra.mxu0 0
        %1590 = vmatprep.mubr.bf16.mxu0 0
        %1591 = vmatmul.mubr.bf16.gmra.mxu0 %v1552
        %v1592 = vpop.f32.mrf.mxu0
        %v1593 = vadd.f32 0.0, %v1592
        %v1594 = vpop.f32.mrf.mxu0
        %v1595 = vpop.f32.mrf.mxu0
        %v1596 = vpop.f32.mrf.mxu0
        %1597 = vdwg.mxu0
        %v1599 = vsel %vm1318, %v1548, 0
        %v1602 = vsel %vm1554, %v1305, 0
        %1604 = vmatprep.subr.bf16.mxu0 0
        %1605 = vmatpush1.bf16.msra.mxu0 0
        %1606 = vmatprep.subr.bf16.mxu0 0
        %1607 = vmatpush1.bf16.msra.mxu0 0
        %1608 = vmatprep.subr.bf16.mxu0 0
        %1609 = vmatpush1.bf16.msra.mxu0 0
        %1610 = vmatprep.subr.bf16.mxu0 0
        %1611 = vmatpush1.bf16.msra.mxu0 0
        %1612 = vmatprep.subr.bf16.mxu0 0
        %1613 = vmatpush1.bf16.msra.mxu0 0
        %1614 = vmatprep.subr.bf16.mxu0 0
        %1615 = vmatpush1.bf16.msra.mxu0 0
        %1616 = vmatprep.subr.bf16.mxu0 0
        %1617 = vmatpush1.bf16.msra.mxu0 0
        %1618 = vmatprep.subr.bf16.mxu0 0
        %1619 = vmatpush1.bf16.msra.mxu0 %v1602
        %1620 = vmatprep.subr.bf16.mxu0 0
        %1621 = vmatpush2.bf16.msra.mxu0 0
        %1622 = vmatprep.subr.bf16.mxu0 0
        %1623 = vmatpush2.bf16.msra.mxu0 0
        %1624 = vmatprep.subr.bf16.mxu0 0
        %1625 = vmatpush2.bf16.msra.mxu0 0
        %1626 = vmatprep.subr.bf16.mxu0 0
        %1627 = vmatpush2.bf16.msra.mxu0 0
        %1628 = vmatprep.subr.bf16.mxu0 0
        %1629 = vmatpush2.bf16.msra.mxu0 0
        %1630 = vmatprep.subr.bf16.mxu0 0
        %1631 = vmatpush2.bf16.msra.mxu0 0
        %1632 = vmatprep.subr.bf16.mxu0 0
        %1633 = vmatpush2.bf16.msra.mxu0 0
        %1634 = vmatprep.subr.bf16.mxu0 0
        %1635 = vmatpush2.bf16.msra.mxu0 0
        %1636 = vmatprep.mubr.bf16.mxu0 0
        %1637 = vmatmul.mubr.bf16.gmra.mxu0 %v1599
        %v1638 = vpop.f32.mrf.mxu0
        %v1639 = vadd.f32 0.0, %v1638
        %v1640 = vpop.f32.mrf.mxu0
        %v1641 = vpop.f32.mrf.mxu0
        %v1642 = vpop.f32.mrf.mxu0
        %1643 = vdwg.mxu0
        %v1645 = vsel %vm1318, %v1549, 0
        %v1648 = vsel %vm1554, %v1308, 0
        %1650 = vmatprep.subr.bf16.mxu0 0
        %1651 = vmatpush1.bf16.msra.mxu0 0
        %1652 = vmatprep.subr.bf16.mxu0 0
        %1653 = vmatpush1.bf16.msra.mxu0 0
        %1654 = vmatprep.subr.bf16.mxu0 0
        %1655 = vmatpush1.bf16.msra.mxu0 0
        %1656 = vmatprep.subr.bf16.mxu0 0
        %1657 = vmatpush1.bf16.msra.mxu0 0
        %1658 = vmatprep.subr.bf16.mxu0 0
        %1659 = vmatpush1.bf16.msra.mxu0 0
        %1660 = vmatprep.subr.bf16.mxu0 0
        %1661 = vmatpush1.bf16.msra.mxu0 0
        %1662 = vmatprep.subr.bf16.mxu0 0
        %1663 = vmatpush1.bf16.msra.mxu0 0
        %1664 = vmatprep.subr.bf16.mxu0 0
        %1665 = vmatpush1.bf16.msra.mxu0 %v1648
        %1666 = vmatprep.subr.bf16.mxu0 0
        %1667 = vmatpush2.bf16.msra.mxu0 0
        %1668 = vmatprep.subr.bf16.mxu0 0
        %1669 = vmatpush2.bf16.msra.mxu0 0
        %1670 = vmatprep.subr.bf16.mxu0 0
        %1671 = vmatpush2.bf16.msra.mxu0 0
        %1672 = vmatprep.subr.bf16.mxu0 0
        %1673 = vmatpush2.bf16.msra.mxu0 0
        %1674 = vmatprep.subr.bf16.mxu0 0
        %1675 = vmatpush2.bf16.msra.mxu0 0
        %1676 = vmatprep.subr.bf16.mxu0 0
        %1677 = vmatpush2.bf16.msra.mxu0 0
        %1678 = vmatprep.subr.bf16.mxu0 0
        %1679 = vmatpush2.bf16.msra.mxu0 0
        %1680 = vmatprep.subr.bf16.mxu0 0
        %1681 = vmatpush2.bf16.msra.mxu0 0
        %1682 = vmatprep.mubr.bf16.mxu0 0
        %1683 = vmatmul.mubr.bf16.gmra.mxu0 %v1645
        %v1684 = vpop.f32.mrf.mxu0
        %v1685 = vadd.f32 0.0, %v1684
        %v1686 = vpop.f32.mrf.mxu0
        %v1687 = vpop.f32.mrf.mxu0
        %v1688 = vpop.f32.mrf.mxu0
        %1689 = vdwg.mxu0
        %v1691 = vsel %vm1318, %v1550, 0
        %v1694 = vsel %vm1554, %v1311, 0
        %1696 = vmatprep.subr.bf16.mxu0 0
        %1697 = vmatpush1.bf16.msra.mxu0 0
        %1698 = vmatprep.subr.bf16.mxu0 0
        %1699 = vmatpush1.bf16.msra.mxu0 0
        %1700 = vmatprep.subr.bf16.mxu0 0
        %1701 = vmatpush1.bf16.msra.mxu0 0
        %1702 = vmatprep.subr.bf16.mxu0 0
        %1703 = vmatpush1.bf16.msra.mxu0 0
        %1704 = vmatprep.subr.bf16.mxu0 0
        %1705 = vmatpush1.bf16.msra.mxu0 0
        %1706 = vmatprep.subr.bf16.mxu0 0
        %1707 = vmatpush1.bf16.msra.mxu0 0
        %1708 = vmatprep.subr.bf16.mxu0 0
        %1709 = vmatpush1.bf16.msra.mxu0 0
        %1710 = vmatprep.subr.bf16.mxu0 0
        %1711 = vmatpush1.bf16.msra.mxu0 %v1694
        %1712 = vmatprep.subr.bf16.mxu0 0
        %1713 = vmatpush2.bf16.msra.mxu0 0
        %1714 = vmatprep.subr.bf16.mxu0 0
        %1715 = vmatpush2.bf16.msra.mxu0 0
        %1716 = vmatprep.subr.bf16.mxu0 0
        %1717 = vmatpush2.bf16.msra.mxu0 0
        %1718 = vmatprep.subr.bf16.mxu0 0
        %1719 = vmatpush2.bf16.msra.mxu0 0
        %1720 = vmatprep.subr.bf16.mxu0 0
        %1721 = vmatpush2.bf16.msra.mxu0 0
        %1722 = vmatprep.subr.bf16.mxu0 0
        %1723 = vmatpush2.bf16.msra.mxu0 0
        %1724 = vmatprep.subr.bf16.mxu0 0
        %1725 = vmatpush2.bf16.msra.mxu0 0
        %1726 = vmatprep.subr.bf16.mxu0 0
        %1727 = vmatpush2.bf16.msra.mxu0 0
        %1728 = vmatprep.mubr.bf16.mxu0 0
        %1729 = vmatmul.mubr.bf16.gmra.mxu0 %v1691
        %v1730 = vpop.f32.mrf.mxu0
        %v1731 = vadd.f32 0.0, %v1730
        %v1732 = vpop.f32.mrf.mxu0
        %v1733 = vpop.f32.mrf.mxu0
        %v1734 = vpop.f32.mrf.mxu0
        %1735 = vdwg.mxu0
        %v1736 = vcombine.low %v1593, %v1685
        %v1737 = vcombine.high %v1593, %v1685
        %v1739 = vunpack.c.l.s4 1983009808
        %v1740 = vunpack.c.0.s8 %v1739
        %v1741 = vlaneseq
        %v1742 = vshrl.u32 %v1741, 7
        %v1743 = vsub.s32 %v1740, %v1742
        %v1744 = vrot.slane %v1736, %v1743
        %v1746 = vunpack.c.l.s4 1983009808
        %v1747 = vunpack.c.0.s8 %v1746
        %v1748 = vlaneseq
        %v1749 = vshrl.u32 %v1748, 7
        %v1750 = vsub.s32 %v1747, %v1749
        %v1751 = vrot.slane %v1737, %v1750
        %v1752 = vcombine.low %v1639, %v1731
        %v1753 = vcombine.high %v1639, %v1731
        %v1755 = vunpack.c.l.s4 1983009808
        %v1756 = vunpack.c.0.s8 %v1755
        %v1757 = vlaneseq
        %v1758 = vshrl.u32 %v1757, 7
        %v1759 = vsub.s32 %v1756, %v1758
        %v1760 = vrot.slane %v1752, %v1759
        %v1762 = vunpack.c.l.s4 1983009808
        %v1763 = vunpack.c.0.s8 %v1762
        %v1764 = vlaneseq
        %v1765 = vshrl.u32 %v1764, 7
        %v1766 = vsub.s32 %v1763, %v1765
        %v1767 = vrot.slane %v1753, %v1766
        %v1768 = vcombine.low %v1744, %v1760
        %v1769 = vcombine.high %v1744, %v1760
        %v1771 = vunpack.c.l.s4 1934713408
        %v1772 = vunpack.c.0.s8 %v1771
        %v1773 = vlaneseq
        %v1774 = vshrl.u32 %v1773, 7
        %v1775 = vsub.s32 %v1772, %v1774
        %v1776 = vrot.slane %v1768, %v1775
        %v1778 = vunpack.c.l.s4 1934713408
        %v1779 = vunpack.c.0.s8 %v1778
        %v1780 = vlaneseq
        %v1781 = vshrl.u32 %v1780, 7
        %v1782 = vsub.s32 %v1779, %v1781
        %v1783 = vrot.slane %v1769, %v1782
        %v1784 = vcombine.low %v1751, %v1767
        %v1785 = vcombine.high %v1751, %v1767
        %v1787 = vunpack.c.l.s4 1934713408
        %v1788 = vunpack.c.0.s8 %v1787
        %v1789 = vlaneseq
        %v1790 = vshrl.u32 %v1789, 7
        %v1791 = vsub.s32 %v1788, %v1790
        %v1792 = vrot.slane %v1784, %v1791
        %v1794 = vunpack.c.l.s4 1934713408
        %v1795 = vunpack.c.0.s8 %v1794
        %v1796 = vlaneseq
        %v1797 = vshrl.u32 %v1796, 7
        %v1798 = vsub.s32 %v1795, %v1797
        %v1799 = vrot.slane %v1785, %v1798
        %v1800 = vcombine.high %v1776, 0.0
        %v1801 = vcombine.high %v1783, 0.0
        %v1802 = vcombine.high %v1792, 0.0
        %v1803 = vcombine.high %v1799, 0.0
        %v1804 = vcombine.low %v1776, %v1783
        %v1806 = vunpack.c.l.s4 1983009808
        %v1807 = vunpack.c.0.s8 %v1806
        %v1808 = vlaneseq
        %v1809 = vshrl.u32 %v1808, 7
        %v1810 = vsub.s32 %v1807, %v1809
        %v1811 = vrot.slane %v1804, %v1810
        %v1812 = vcombine.low %v1800, %v1801
        %v1814 = vunpack.c.l.s4 1983009808
        %v1815 = vunpack.c.0.s8 %v1814
        %v1816 = vlaneseq
        %v1817 = vshrl.u32 %v1816, 7
        %v1818 = vsub.s32 %v1815, %v1817
        %v1819 = vrot.slane %v1812, %v1818
        %v1820 = vcombine.low %v1792, %v1799
        %v1822 = vunpack.c.l.s4 1983009808
        %v1823 = vunpack.c.0.s8 %v1822
        %v1824 = vlaneseq
        %v1825 = vshrl.u32 %v1824, 7
        %v1826 = vsub.s32 %v1823, %v1825
        %v1827 = vrot.slane %v1820, %v1826
        %v1828 = vcombine.low %v1802, %v1803
        %v1830 = vunpack.c.l.s4 1983009808
        %v1831 = vunpack.c.0.s8 %v1830
        %v1832 = vlaneseq
        %v1833 = vshrl.u32 %v1832, 7
        %v1834 = vsub.s32 %v1831, %v1833
        %v1835 = vrot.slane %v1828, %v1834
        %v1836 = vcombine.low %v1811, %v1819
        %v1837 = vcombine.high %v1811, %v1819
        %v1839 = vunpack.c.l.s4 1934713408
        %v1840 = vunpack.c.0.s8 %v1839
        %v1841 = vlaneseq
        %v1842 = vshrl.u32 %v1841, 7
        %v1843 = vsub.s32 %v1840, %v1842
        %v1844 = vrot.slane %v1836, %v1843
        %v1846 = vunpack.c.l.s4 1934713408
        %v1847 = vunpack.c.0.s8 %v1846
        %v1848 = vlaneseq
        %v1849 = vshrl.u32 %v1848, 7
        %v1850 = vsub.s32 %v1847, %v1849
        %v1851 = vrot.slane %v1837, %v1850
        %v1852 = vcombine.low %v1827, %v1835
        %v1853 = vcombine.high %v1827, %v1835
        %v1855 = vunpack.c.l.s4 1934713408
        %v1856 = vunpack.c.0.s8 %v1855
        %v1857 = vlaneseq
        %v1858 = vshrl.u32 %v1857, 7
        %v1859 = vsub.s32 %v1856, %v1858
        %v1860 = vrot.slane %v1852, %v1859
        %v1862 = vunpack.c.l.s4 1934713408
        %v1863 = vunpack.c.0.s8 %v1862
        %v1864 = vlaneseq
        %v1865 = vshrl.u32 %v1864, 7
        %v1866 = vsub.s32 %v1863, %v1865
        %v1867 = vrot.slane %v1853, %v1866
        %v1868 = vcombine.low %v1844, %v1860
        %v1869 = vcombine.high %v1844, %v1860
        %v1870 = vcombine.low %v1851, %v1867
        %v1871 = vcombine.high %v1851, %v1867
        %1873 = vrot.lane.b32.xlu0 %v1869, 8
        %v1874 = vpop.permute.xlu0 %1873
        %1877 = vrot.lane.b32.xlu0 %v1870, 16
        %v1878 = vpop.permute.xlu0 %1877
        %1881 = vrot.lane.b32.xlu0 %v1871, 24
        %v1882 = vpop.permute.xlu0 %1881
        %v1884 = vsel %vm1318, %v1868, %v1874
        %vm1885 = vcmask 130048
        %v1886 = vsel %vm1885, %v1884, %v1878
        %vm1887 = vcmask 195584
        %v1888 = vsel %vm1887, %v1886, %v1882
        %v1889 = vpack.c.bf16 %v1888, %v1888
        %v1890 = vld [vmem:[%s689] sm:$0xf]
        %v1891 = vld [vmem:[%s689 + $0x4] sm:$0xf]
        %v1892 = vld [vmem:[%s689 + $0x8] sm:$0xf]
        %v1893 = vld [vmem:[%s689 + $0xc] sm:$0xf]
        %v1894 = vld [vmem:[%s692] sm:$0x1]
        %v1896 = vlaneseq
        %v1897 = vshrl.u32 %v1896, 7
        %v1898 = vsub.s32 0, %v1897
        %v1899 = vrot.slane %v1894, %v1898
        %v1905 = vunpack.c.l.b16 %v1890
        %v1906 = vunpack.c.l.b16 %v1891
        %v1907 = vunpack.c.l.b16 %v1892
        %v1908 = vunpack.c.l.b16 %v1893
        %v1909 = vpack.c.b16 %v1906, %v1905
        %v1910 = vpack.c.b16 %v1908, %v1907
        %v1914 = vsel %vm759, %v1889, 0
        %1916 = vmatprep.subr.bf16.mxu0 0
        %1917 = vmatpush1.bf16.msra.mxu0 0
        %1918 = vmatprep.subr.bf16.mxu0 0
        %1919 = vmatpush1.bf16.msra.mxu0 0
        %1920 = vmatprep.subr.bf16.mxu0 0
        %1921 = vmatpush1.bf16.msra.mxu0 0
        %1922 = vmatprep.subr.bf16.mxu0 0
        %1923 = vmatpush1.bf16.msra.mxu0 0
        %1924 = vmatprep.subr.bf16.mxu0 0
        %1925 = vmatpush1.bf16.msra.mxu0 0
        %1926 = vmatprep.subr.bf16.mxu0 0
        %1927 = vmatpush1.bf16.msra.mxu0 0
        %1928 = vmatprep.subr.bf16.mxu0 0
        %1929 = vmatpush1.bf16.msra.mxu0 %v1910
        %1930 = vmatprep.subr.bf16.mxu0 0
        %1931 = vmatpush1.bf16.msra.mxu0 %v1909
        %1932 = vmatprep.subr.bf16.mxu0 0
        %1933 = vmatpush2.bf16.msra.mxu0 0
        %1934 = vmatprep.subr.bf16.mxu0 0
        %1935 = vmatpush2.bf16.msra.mxu0 0
        %1936 = vmatprep.subr.bf16.mxu0 0
        %1937 = vmatpush2.bf16.msra.mxu0 0
        %1938 = vmatprep.subr.bf16.mxu0 0
        %1939 = vmatpush2.bf16.msra.mxu0 0
        %1940 = vmatprep.subr.bf16.mxu0 0
        %1941 = vmatpush2.bf16.msra.mxu0 0
        %1942 = vmatprep.subr.bf16.mxu0 0
        %1943 = vmatpush2.bf16.msra.mxu0 0
        %1944 = vmatprep.subr.bf16.mxu0 0
        %1945 = vmatpush2.bf16.msra.mxu0 0
        %1946 = vmatprep.subr.bf16.mxu0 0
        %1947 = vmatpush2.bf16.msra.mxu0 0
        %1948 = vmatprep.mubr.bf16.mxu0 0
        %1949 = vmatmul.mubr.bf16.gmra.mxu0 %v1914
        %v1950 = vpop.f32.mrf.mxu0
        %v1951 = vadd.f32 %v1899, %v1950
        %v1952 = vpop.f32.mrf.mxu0
        %v1953 = vpop.f32.mrf.mxu0
        %v1954 = vpop.f32.mrf.mxu0
        %1955 = vdwg.mxu0
        %v1956 = vadd.f32 %v1951, %v733
        %v1957 = vld [vmem:[%s695] sm:$0x1]
        %v1958 = vld [vmem:[%s698] sm:$0x1]
        %v1959 = vsel %vm759, %v1956, 0.0
        %1960 = vadd.xlane.f32.xlu0 %v1959
        %v1961 = vpop.xlane.xlu0 %1960
        %v1962 = vrcp.pop 32.0
        %v1963 = vmul.f32 %v1961, %v1962
        %v1964 = vsub.f32 %v1956, %v1963
        %v1965 = vmul.f32 %v1964, %v1964
        %v1966 = vsel %vm759, %v1965, 0.0
        %1967 = vadd.xlane.f32.xlu0 %v1966
        %v1968 = vpop.xlane.xlu0 %1967
        %v1969 = vmul.f32 %v1968, %v1962
        %v1970 = vadd.f32 %v1969, 1e-12
        %v1971 = vrsqrt.pop %v1970
        %v1972 = vmul.f32 %v1970, %v1971
        %vm1973 = vcmp.eq.f32.partialorder %v1970, inf
        %v1974 = vsel %vm1973, %v1970, %v1972
        %vm1975 = vcmp.eq.f32.partialorder %v1970, 0.0
        %v1976 = vand.u32 %v1970, 2147483648
        %v1977 = vsel %vm1975, %v1976, %v1974
        %v1978 = vrcp.pop %v1977
        %v1979 = vmul.f32 %v1964, %v1978
        %v1981 = vlaneseq
        %v1982 = vshrl.u32 %v1981, 7
        %v1983 = vsub.s32 0, %v1982
        %v1984 = vrot.slane %v1957, %v1983
        %v1986 = vmul.f32 %v1984, %v1979
        %v1988 = vlaneseq
        %v1989 = vshrl.u32 %v1988, 7
        %v1990 = vsub.s32 0, %v1989
        %v1991 = vrot.slane %v1958, %v1990
        %v1993 = vadd.f32 %v1986, %v1991
        %v1994 = vpack.c.bf16 %v1993, %v1993
        %v1995 = vld [vmem:[%s703] sm:$0xf]
        %v1996 = vld [vmem:[%s703 + $0x4] sm:$0xf]
        %v1997 = vld [vmem:[%s703 + $0x8] sm:$0xf]
        %v1998 = vld [vmem:[%s703 + $0xc] sm:$0xf]
        %v1999 = vld [vmem:[%s706] sm:$0x1]
        %v2001 = vlaneseq
        %v2002 = vshrl.u32 %v2001, 7
        %v2003 = vsub.s32 0, %v2002
        %v2004 = vrot.slane %v1999, %v2003
        %v2010 = vunpack.c.l.b16 %v1995
        %v2011 = vunpack.c.l.b16 %v1996
        %v2012 = vunpack.c.l.b16 %v1997
        %v2013 = vunpack.c.l.b16 %v1998
        %v2014 = vpack.c.b16 %v2011, %v2010
        %v2015 = vpack.c.b16 %v2013, %v2012
        %v2019 = vsel %vm759, %v1994, 0
        %2021 = vmatprep.subr.bf16.mxu0 0
        %2022 = vmatpush1.bf16.msra.mxu0 0
        %2023 = vmatprep.subr.bf16.mxu0 0
        %2024 = vmatpush1.bf16.msra.mxu0 0
        %2025 = vmatprep.subr.bf16.mxu0 0
        %2026 = vmatpush1.bf16.msra.mxu0 0
        %2027 = vmatprep.subr.bf16.mxu0 0
        %2028 = vmatpush1.bf16.msra.mxu0 0
        %2029 = vmatprep.subr.bf16.mxu0 0
        %2030 = vmatpush1.bf16.msra.mxu0 0
        %2031 = vmatprep.subr.bf16.mxu0 0
        %2032 = vmatpush1.bf16.msra.mxu0 0
        %2033 = vmatprep.subr.bf16.mxu0 0
        %2034 = vmatpush1.bf16.msra.mxu0 %v2015
        %2035 = vmatprep.subr.bf16.mxu0 0
        %2036 = vmatpush1.bf16.msra.mxu0 %v2014
        %2037 = vmatprep.subr.bf16.mxu0 0
        %2038 = vmatpush2.bf16.msra.mxu0 0
        %2039 = vmatprep.subr.bf16.mxu0 0
        %2040 = vmatpush2.bf16.msra.mxu0 0
        %2041 = vmatprep.subr.bf16.mxu0 0
        %2042 = vmatpush2.bf16.msra.mxu0 0
        %2043 = vmatprep.subr.bf16.mxu0 0
        %2044 = vmatpush2.bf16.msra.mxu0 0
        %2045 = vmatprep.subr.bf16.mxu0 0
        %2046 = vmatpush2.bf16.msra.mxu0 0
        %2047 = vmatprep.subr.bf16.mxu0 0
        %2048 = vmatpush2.bf16.msra.mxu0 0
        %2049 = vmatprep.subr.bf16.mxu0 0
        %2050 = vmatpush2.bf16.msra.mxu0 0
        %2051 = vmatprep.subr.bf16.mxu0 0
        %2052 = vmatpush2.bf16.msra.mxu0 0
        %2053 = vmatprep.mubr.bf16.mxu0 0
        %2054 = vmatmul.mubr.bf16.gmra.mxu0 %v2019
        %v2055 = vpop.f32.mrf.mxu0
        %v2056 = vadd.f32 %v2004, %v2055
        %v2057 = vpop.f32.mrf.mxu0
        %v2058 = vpop.f32.mrf.mxu0
        %v2059 = vpop.f32.mrf.mxu0
        %2060 = vdwg.mxu0
        %v2061 = vmax.f32 %v2056, 0.0
        %v2062 = vpack.c.bf16 %v2061, %v2061
        %v2063 = vld [vmem:[%s711] sm:$0xf]
        %v2064 = vld [vmem:[%s711 + $0x4] sm:$0xf]
        %v2065 = vld [vmem:[%s711 + $0x8] sm:$0xf]
        %v2066 = vld [vmem:[%s711 + $0xc] sm:$0xf]
        %v2067 = vld [vmem:[%s711 + $0x10] sm:$0xf]
        %v2068 = vld [vmem:[%s711 + $0x14] sm:$0xf]
        %v2069 = vld [vmem:[%s711 + $0x18] sm:$0xf]
        %v2070 = vld [vmem:[%s711 + $0x1c] sm:$0xf]
        %v2071 = vld [vmem:[%s714] sm:$0x1]
        %v2073 = vlaneseq
        %v2074 = vshrl.u32 %v2073, 7
        %v2075 = vsub.s32 0, %v2074
        %v2076 = vrot.slane %v2071, %v2075
        %v2086 = vunpack.c.l.b16 %v2063
        %v2087 = vunpack.c.l.b16 %v2064
        %v2088 = vunpack.c.l.b16 %v2065
        %v2089 = vunpack.c.l.b16 %v2066
        %v2090 = vunpack.c.l.b16 %v2067
        %v2091 = vunpack.c.l.b16 %v2068
        %v2092 = vunpack.c.l.b16 %v2069
        %v2093 = vunpack.c.l.b16 %v2070
        %v2094 = vpack.c.b16 %v2087, %v2086
        %v2095 = vpack.c.b16 %v2089, %v2088
        %v2096 = vpack.c.b16 %v2091, %v2090
        %v2097 = vpack.c.b16 %v2093, %v2092
        %vm2102 = vcmask 523264
        %v2104 = vsel %vm2102, %v2062, 0
        %2106 = vmatprep.subr.bf16.mxu0 0
        %2107 = vmatpush1.bf16.msra.mxu0 0
        %2108 = vmatprep.subr.bf16.mxu0 0
        %2109 = vmatpush1.bf16.msra.mxu0 0
        %2110 = vmatprep.subr.bf16.mxu0 0
        %2111 = vmatpush1.bf16.msra.mxu0 0
        %2112 = vmatprep.subr.bf16.mxu0 0
        %2113 = vmatpush1.bf16.msra.mxu0 0
        %2114 = vmatprep.subr.bf16.mxu0 0
        %2115 = vmatpush1.bf16.msra.mxu0 %v2097
        %2116 = vmatprep.subr.bf16.mxu0 0
        %2117 = vmatpush1.bf16.msra.mxu0 %v2096
        %2118 = vmatprep.subr.bf16.mxu0 0
        %2119 = vmatpush1.bf16.msra.mxu0 %v2095
        %2120 = vmatprep.subr.bf16.mxu0 0
        %2121 = vmatpush1.bf16.msra.mxu0 %v2094
        %2122 = vmatprep.subr.bf16.mxu0 0
        %2123 = vmatpush2.bf16.msra.mxu0 0
        %2124 = vmatprep.subr.bf16.mxu0 0
        %2125 = vmatpush2.bf16.msra.mxu0 0
        %2126 = vmatprep.subr.bf16.mxu0 0
        %2127 = vmatpush2.bf16.msra.mxu0 0
        %2128 = vmatprep.subr.bf16.mxu0 0
        %2129 = vmatpush2.bf16.msra.mxu0 0
        %2130 = vmatprep.subr.bf16.mxu0 0
        %2131 = vmatpush2.bf16.msra.mxu0 0
        %2132 = vmatprep.subr.bf16.mxu0 0
        %2133 = vmatpush2.bf16.msra.mxu0 0
        %2134 = vmatprep.subr.bf16.mxu0 0
        %2135 = vmatpush2.bf16.msra.mxu0 0
        %2136 = vmatprep.subr.bf16.mxu0 0
        %2137 = vmatpush2.bf16.msra.mxu0 0
        %2138 = vmatprep.mubr.bf16.mxu0 0
        %2139 = vmatmul.mubr.bf16.gmra.mxu0 %v2104
        %v2140 = vpop.f32.mrf.mxu0
        %v2141 = vadd.f32 %v2076, %v2140
        %v2142 = vpop.f32.mrf.mxu0
        %v2143 = vpop.f32.mrf.mxu0
        %v2144 = vpop.f32.mrf.mxu0
        %2145 = vdwg.mxu0
        %v2146 = vadd.f32 %v2141, %v1993
        %v2147 = vld [vmem:[%s717] sm:$0x1]
        %v2148 = vld [vmem:[%s720] sm:$0x1]
        %v2149 = vsel %vm759, %v2146, 0.0
        %2150 = vadd.xlane.f32.xlu0 %v2149
        %v2151 = vpop.xlane.xlu0 %2150
        %v2152 = vmul.f32 %v2151, %v1962
        %v2153 = vsub.f32 %v2146, %v2152
        %v2154 = vmul.f32 %v2153, %v2153
        %v2155 = vsel %vm759, %v2154, 0.0
        %2156 = vadd.xlane.f32.xlu0 %v2155
        %v2157 = vpop.xlane.xlu0 %2156
        %v2158 = vmul.f32 %v2157, %v1962
        %v2159 = vadd.f32 %v2158, 1e-12
        %v2160 = vrsqrt.pop %v2159
        %v2161 = vmul.f32 %v2159, %v2160
        %vm2162 = vcmp.eq.f32.partialorder %v2159, inf
        %v2163 = vsel %vm2162, %v2159, %v2161
        %vm2164 = vcmp.eq.f32.partialorder %v2159, 0.0
        %v2165 = vand.u32 %v2159, 2147483648
        %v2166 = vsel %vm2164, %v2165, %v2163
        %v2167 = vrcp.pop %v2166
        %v2168 = vmul.f32 %v2153, %v2167
        %v2170 = vlaneseq
        %v2171 = vshrl.u32 %v2170, 7
        %v2172 = vsub.s32 0, %v2171
        %v2173 = vrot.slane %v2147, %v2172
        %v2175 = vmul.f32 %v2173, %v2168
        %v2177 = vlaneseq
        %v2178 = vshrl.u32 %v2177, 7
        %v2179 = vsub.s32 0, %v2178
        %v2180 = vrot.slane %v2148, %v2179
        %v2182 = vadd.f32 %v2175, %v2180
        %2183 = vst.msk [vmem:[%s732] sm:$0xff] %vm759, %v2182
        %2184 = vst.msk [vmem:[%s676] sm:$0xff] %vm759, %v2182
        %s2185 = sand.u32 %s418, 1
        %s2186 = scalar_lea.sflag [#allocation5], %s2185
        %s2187 = sand.u32 %s418, 1
        %s2188 = smul.addr %s2187, 8
        %s2189 = scalar_lea.vmem [#allocation8], %s2188
        // Predicated region
        $region89: #{tpu_custom_call.1} parent=75 // pred_check
          %p2190 = pneg %p428
        $region90: #{tpu_custom_call.1} parent=75 // pred_check_branch
          %2192 = sbr.rel (%p2190) target = $region92
        $region91: #{tpu_custom_call.1} parent=75 // pred_region
          %s2194 = ssub.s32 128, 128
          %2195 = vsyncadd %s2186, %s2194
          %s2196 = smul.addr %s39, 128
          %s2197 = scalar_lea.hbm %s14, %s2196
          %s2199 = sshll.u32 %s2189, 4
          %s2200 = int_to_ptr.vmem [resolvable:$true] %s2199
          %2202 = dma.vmem_to_hbm [thread:$0]  %s2200, 128, %s2197, %s2186
        $region92: #{tpu_custom_call.1} parent=75 // pred_fallthru
          _
      $region76: #{tpu_custom_call.1} parent=5 // pred_fallthru
        _
      %p2203 = scmp.le.s32.totalorder 2, %s29
      // Predicated region
      $region93: #{tpu_custom_call.1} parent=5 // pred_check
        %p2204 = pneg %p2203
      $region94: #{tpu_custom_call.1} parent=5 // pred_check_branch
        %2206 = sbr.rel (%p2204) target = $region96
      $region95: #{tpu_custom_call.1} parent=5 // pred_region
        %s2207 = ssub.s32 %s29, 2
        // Predicated region
        $region97: #{tpu_custom_call.1} parent=95 // pred_check
          %p2208 = pneg %p434
        $region98: #{tpu_custom_call.1} parent=95 // pred_check_branch
          %2210 = sbr.rel (%p2208) target = $region100
        $region99: #{tpu_custom_call.1} parent=95 // pred_region
          %s2211 = sand.u32 %s419, 1
          %s2212 = scalar_lea.sflag [#allocation5], %s2211
          %s2213 = sand.u32 %s419, 1
          %s2214 = smul.addr %s2213, 8
          %s2215 = scalar_lea.vmem [#allocation8], %s2214
          %2216 = dma.done %s2212, 128
        $region100: #{tpu_custom_call.1} parent=95 // pred_fallthru
          _
      $region96: #{tpu_custom_call.1} parent=5 // pred_fallthru
        _
    $region6: #{tpu_custom_call.1} parent=1 // loop_footer
      %s33 = sadd.s32 1, %s29
    $region7: #{tpu_custom_call.1} parent=1 // loop_footer_branch
      %28 = sbr.rel target = $region3
    $region8: #{tpu_custom_call.1} parent=1 // loop_exit
      _
    %2217 = vsyncpa [#allocation4], 1
    %s2218 = scalar_lea.sflag [#allocation4], 1
    %2219 = vsyncpa %s2218, 1
    %2220 = vsyncpa [#allocation7], 1
    %s2221 = scalar_lea.sflag [#allocation7], 1
    %2222 = vsyncpa %s2221, 1
    %2223 = vsyncpa [#allocation5], 1
    %s2224 = scalar_lea.sflag [#allocation5], 1
    %2225 = vsyncpa %s2224, 1

</llo_original>
